<compile_context>
chip_gen: v6e
topology: v6e:2x2x1
jax: 0.10.0
libtpu: 0.0.40
codegen_flags: <defaults>
</compile_context>

<pallas_src>
import jax
import jax.numpy as jnp
from jax import lax
from jax.experimental import pallas as pl
from jax.experimental.pallas import tpu as pltpu

MM_DTYPE = jnp.bfloat16  # MXU operand dtype (accumulation stays f32)


# ----------------------------- in-kernel helpers ----------------------------


def _conv3x3_folded(h, w_ref, pad_ref):
    """3x3 'SAME' conv of one (Ho, Wo, Cin) tile as a single folded matmul.

    h       : (Ho, Wo, Cin) activations (float)
    w_ref   : (9*Cin, Cout) folded weights, tap order (dy, dx, cin), MM_DTYPE
    pad_ref : (Ho+2, Wo+2, Cin) VMEM scratch, MM_DTYPE
    returns : (Ho*Wo, Cout) float32
    """
    Ho, Wo, Cin = h.shape
    pad_ref[...] = jnp.zeros_like(pad_ref)
    pad_ref[1:Ho + 1, 1:Wo + 1, :] = h.astype(pad_ref.dtype)
    patches = jnp.concatenate(
        [pad_ref[dy:dy + Ho, dx:dx + Wo, :] for dy in range(3) for dx in range(3)],
        axis=-1,
    )  # (Ho, Wo, 9*Cin)
    return jnp.dot(
        patches.reshape(Ho * Wo, 9 * Cin),
        w_ref[...],
        preferred_element_type=jnp.float32,
    )


def _accum_stats(stats_ref, y):
    """Accumulate per-channel [sum; sum-of-squares] across the batch grid axis."""
    contrib = jnp.concatenate(
        [jnp.sum(y, axis=0, keepdims=True), jnp.sum(y * y, axis=0, keepdims=True)],
        axis=0,
    )  # (2, Cout)
    n = pl.program_id(0)

    @pl.when(n == 0)
    def _():
        stats_ref[...] = contrib

    @pl.when(n != 0)
    def _():
        stats_ref[...] += contrib


# ------------------------------- Pallas kernels ------------------------------


def _pool_conv_stats_kernel(x_ref, w_ref, z_ref, stats_ref, pad_ref):
    # x_ref: (1, H, Wo, 2*Cin) raw input with each pooling W-pair packed in lanes.
    _, H, Wo, C2 = x_ref.shape
    Cin, Ho = C2 // 2, H // 2
    xw = x_ref[0]
    a = jnp.maximum(xw[:, :, :Cin], xw[:, :, Cin:])        # pool over W
    a = a.reshape(Ho, 2, Wo, Cin)
    p = jnp.maximum(a[:, 0], a[:, 1])                       # pool over H
    y = _conv3x3_folded(p, w_ref, pad_ref)                  # (Ho*Wo, Cmid) f32
    z_ref[0] = y.reshape(Ho, Wo, y.shape[-1])
    _accum_stats(stats_ref, y)


def _bn_relu_conv_stats_kernel(z_ref, scale_ref, shift_ref, w_ref, o_ref, stats_ref,
                               pad_ref):
    z = z_ref[0]                                            # (Ho, Wo, Cmid) f32
    h = jnp.maximum(z * scale_ref[0] + shift_ref[0], 0.0)   # BN1 apply + ReLU
    y = _conv3x3_folded(h, w_ref, pad_ref)                  # (Ho*Wo, Cout) f32
    Ho, Wo, _ = z.shape
    o_ref[0] = y.reshape(Ho, Wo, y.shape[-1])
    _accum_stats(stats_ref, y)


def _bn_relu_kernel(z_ref, scale_ref, shift_ref, o_ref):
    o_ref[0] = jnp.maximum(z_ref[0] * scale_ref[0] + shift_ref[0], 0.0)


# ---------------------------------- wrapper ----------------------------------


def _bn_scale_shift(stats, gamma, beta, count, eps):
    """Fold training-mode BN (batch mean / biased var) + affine into scale/shift."""
    mean = stats[0] / count
    var = jnp.maximum(stats[1] / count - mean * mean, 0.0)
    scale = gamma * lax.rsqrt(var + eps)
    shift = beta - mean * scale
    return scale.reshape(1, -1).astype(jnp.float32), shift.reshape(1, -1).astype(jnp.float32)


def unet_downsample(x_nhwc, w1, g1, b1, w2, g2, b2, *, eps=1e-5):
    """MaxPool2d(2) -> Conv3x3/BN/ReLU -> Conv3x3/BN/ReLU (NHWC, HWIO weights)."""
    N, H, W, Cin = x_nhwc.shape
    assert H % 2 == 0 and W % 2 == 0, "MaxPool2d(2) path assumes even H, W"
    Ho, Wo = H // 2, W // 2
    Cmid = w1.shape[-1]
    Cout = w2.shape[-1]
    M = N * Ho * Wo  # rows seen by each BatchNorm

    # Free reshape: pack each pooling W-pair side-by-side in the lane dim.
    xr = x_nhwc.reshape(N, H, Wo, 2 * Cin)
    # Fold the 3x3 taps into the contraction dim; bf16 MXU operands.
    w1f = w1.reshape(9 * Cin, Cmid).astype(MM_DTYPE)
    w2f = w2.reshape(9 * Cmid, Cout).astype(MM_DTYPE)

    # Stage 1: maxpool + conv1 (pre-BN) + per-channel sum / sumsq.
    z1, s1 = pl.pallas_call(
        _pool_conv_stats_kernel,
        out_shape=(
            jax.ShapeDtypeStruct((N, Ho, Wo, Cmid), jnp.float32),
            jax.ShapeDtypeStruct((2, Cmid), jnp.float32),
        ),
        grid=(N,),
        in_specs=[
            pl.BlockSpec((1, H, Wo, 2 * Cin), lambda n: (n, 0, 0, 0)),
            pl.BlockSpec((9 * Cin, Cmid), lambda n: (0, 0)),
        ],
        out_specs=(
            pl.BlockSpec((1, Ho, Wo, Cmid), lambda n: (n, 0, 0, 0)),
            pl.BlockSpec((2, Cmid), lambda n: (0, 0)),
        ),
        scratch_shapes=[pltpu.VMEM((Ho + 2, Wo + 2, Cin), MM_DTYPE)],
        compiler_params=pltpu.CompilerParams(dimension_semantics=("arbitrary",)),
    )(xr, w1f)
    scale1, shift1 = _bn_scale_shift(s1, g1, b1, M, eps)

    # Stage 2: BN1-apply + ReLU + conv2 (pre-BN) + stats, fused in one kernel.
    z2, s2 = pl.pallas_call(
        _bn_relu_conv_stats_kernel,
        out_shape=(
            jax.ShapeDtypeStruct((N, Ho, Wo, Cout), jnp.float32),
            jax.ShapeDtypeStruct((2, Cout), jnp.float32),
        ),
        grid=(N,),
        in_specs=[
            pl.BlockSpec((1, Ho, Wo, Cmid), lambda n: (n, 0, 0, 0)),
            pl.BlockSpec((1, Cmid), lambda n: (0, 0)),
            pl.BlockSpec((1, Cmid), lambda n: (0, 0)),
            pl.BlockSpec((9 * Cmid, Cout), lambda n: (0, 0)),
        ],
        out_specs=(
            pl.BlockSpec((1, Ho, Wo, Cout), lambda n: (n, 0, 0, 0)),
            pl.BlockSpec((2, Cout), lambda n: (0, 0)),
        ),
        scratch_shapes=[pltpu.VMEM((Ho + 2, Wo + 2, Cmid), MM_DTYPE)],
        compiler_params=pltpu.CompilerParams(dimension_semantics=("arbitrary",)),
    )(z1, scale1, shift1, w2f)
    scale2, shift2 = _bn_scale_shift(s2, g2, b2, M, eps)

    # Stage 3: final BN2 + ReLU (pointwise, megacore-parallel over batch).
    out = pl.pallas_call(
        _bn_relu_kernel,
        out_shape=jax.ShapeDtypeStruct((N, Ho, Wo, Cout), jnp.float32),
        grid=(N,),
        in_specs=[
            pl.BlockSpec((1, Ho, Wo, Cout), lambda n: (n, 0, 0, 0)),
            pl.BlockSpec((1, Cout), lambda n: (0, 0)),
            pl.BlockSpec((1, Cout), lambda n: (0, 0)),
        ],
        out_specs=pl.BlockSpec((1, Ho, Wo, Cout), lambda n: (n, 0, 0, 0)),
        compiler_params=pltpu.CompilerParams(dimension_semantics=("parallel",)),
    )(z2, scale2, shift2)
    return out


# ----------------------------- pure-JAX reference ----------------------------


def _ref_cbr(y, w, g, b, eps=1e-5):
    z = lax.conv_general_dilated(
        y, w, window_strides=(1, 1), padding="SAME",
        dimension_numbers=("NHWC", "HWIO", "NHWC"), precision=lax.Precision.HIGHEST)
    m = jnp.mean(z, axis=(0, 1, 2), keepdims=True)
    v = jnp.mean(jnp.square(z - m), axis=(0, 1, 2), keepdims=True)
    return jnp.maximum((z - m) * lax.rsqrt(v + eps) * g + b, 0.0)


def ref_downsample(x, w1, g1, b1, w2, g2, b2):
    N, H, W, C = x.shape
    p = x.reshape(N, H // 2, 2, W // 2, 2, C).max(axis=(2, 4))
    h = _ref_cbr(p, w1, g1, b1)
    return _ref_cbr(h, w2, g2, b2)


# ------------------------------------ main ------------------------------------

if __name__ == "__main__":
    N, Cin, H, W = 2, 4, 16, 16
    Cout = 8

    key = jax.random.PRNGKey(0)
    k1, k2, k3, k4, k5, k6, k7 = jax.random.split(key, 7)

    x_nchw = jax.random.normal(k1, (N, Cin, H, W), jnp.float32)     # PyTorch NCHW input
    # Conv weights in HWIO (torch equivalent shape would be (Cout, Cin, 3, 3)).
    w1 = 0.2 * jax.random.normal(k2, (3, 3, Cin, Cout), jnp.float32)
    w2 = 0.2 * jax.random.normal(k3, (3, 3, Cout, Cout), jnp.float32)
    # BatchNorm affine params.
    g1 = 1.0 + 0.1 * jax.random.normal(k4, (Cout,), jnp.float32)
    b1 = 0.1 * jax.random.normal(k5, (Cout,), jnp.float32)
    g2 = 1.0 + 0.1 * jax.random.normal(k6, (Cout,), jnp.float32)
    b2 = 0.1 * jax.random.normal(k7, (Cout,), jnp.float32)

    x_nhwc = jnp.transpose(x_nchw, (0, 2, 3, 1))                     # NCHW -> NHWC

    out = jax.jit(unet_downsample)(x_nhwc, w1, g1, b1, w2, g2, b2)
    out = jax.block_until_ready(out)
    assert out.shape == (N, H // 2, W // 2, Cout), out.shape

    ref = ref_downsample(x_nhwc, w1, g1, b1, w2, g2, b2)
    # Tolerance accounts for bf16 MXU operands (f32 accumulation) in the kernels
    # vs. the f32 HIGHEST-precision reference.
    err = float(jnp.max(jnp.abs(out - ref)))
    assert err < 5e-2, f"max abs diff vs reference: {err}"

    print("KERNEL_OK")
</pallas_src>

<mosaic_0001>
module attributes {stable_mosaic.version = 11 : i64} {
  func.func @_bn_relu_kernel(%arg0: i32, %arg1: memref<1x8x8x8xf32, #tpu.memory_space<vmem>>, %arg2: memref<1x8xf32, #tpu.memory_space<vmem>>, %arg3: memref<1x8xf32, #tpu.memory_space<vmem>>, %arg4: memref<1x8x8x8xf32, #tpu.memory_space<vmem>>) attributes {dimension_semantics = [#tpu.dimension_semantics<parallel>], iteration_bounds = array<i64: 2>, scalar_prefetch = 0 : i64, scratch_operands = 0 : i64, tpu.core_type = #tpu.core_type<tc>, window_params = [{transform_indices = @transform_0, window_bounds = array<i64: 1, 8, 8, 8>}, {pipeline_mode = #tpu.pipeline_mode<synchronous>, transform_indices = @transform_1, window_bounds = array<i64: 1, 8>}, {pipeline_mode = #tpu.pipeline_mode<synchronous>, transform_indices = @transform_2, window_bounds = array<i64: 1, 8>}, {transform_indices = @transform_3, window_bounds = array<i64: 1, 8, 8, 8>}]} {
    %c0 = arith.constant 0 : index
    %c0_0 = arith.constant 0 : index
    %c0_1 = arith.constant 0 : index
    %c0_2 = arith.constant 0 : index
    %0 = vector.load %arg1[%c0, %c0_0, %c0_1, %c0_2] : memref<1x8x8x8xf32, #tpu.memory_space<vmem>>, vector<1x8x8x8xf32>
    %1 = vector.shape_cast %0 : vector<1x8x8x8xf32> to vector<8x8x8xf32>
    %c0_3 = arith.constant 0 : index
    %c0_4 = arith.constant 0 : index
    %2 = vector.load %arg2[%c0_3, %c0_4] : memref<1x8xf32, #tpu.memory_space<vmem>>, vector<1x8xf32>
    %3 = vector.shape_cast %2 : vector<1x8xf32> to vector<8xf32>
    %4 = vector.shape_cast %3 : vector<8xf32> to vector<1x1x8xf32>
    %5 = vector.broadcast %4 : vector<1x1x8xf32> to vector<8x8x8xf32>
    %6 = arith.mulf %1, %5 : vector<8x8x8xf32>
    %c0_5 = arith.constant 0 : index
    %c0_6 = arith.constant 0 : index
    %7 = vector.load %arg3[%c0_5, %c0_6] : memref<1x8xf32, #tpu.memory_space<vmem>>, vector<1x8xf32>
    %8 = vector.shape_cast %7 : vector<1x8xf32> to vector<8xf32>
    %9 = vector.shape_cast %8 : vector<8xf32> to vector<1x1x8xf32>
    %10 = vector.broadcast %9 : vector<1x1x8xf32> to vector<8x8x8xf32>
    %11 = arith.addf %6, %10 : vector<8x8x8xf32>
    %cst = arith.constant 0.000000e+00 : f32
    %12 = vector.broadcast %cst : f32 to vector<8x8x8xf32>
    %13 = arith.maximumf %11, %12 : vector<8x8x8xf32>
    %c0_7 = arith.constant 0 : index
    %c0_8 = arith.constant 0 : index
    %c0_9 = arith.constant 0 : index
    %c0_10 = arith.constant 0 : index
    %14 = vector.load %arg4[%c0_7, %c0_8, %c0_9, %c0_10] : memref<1x8x8x8xf32, #tpu.memory_space<vmem>>, vector<1x8x8x8xf32>
    %15 = vector.shape_cast %14 : vector<1x8x8x8xf32> to vector<8x8x8xf32>
    %16 = vector.shape_cast %13 : vector<8x8x8xf32> to vector<1x8x8x8xf32>
    tpu.vector_store %arg4[%c0_7, %c0_8, %c0_9, %c0_10], %16 {strides = array<i32>} : memref<1x8x8x8xf32, #tpu.memory_space<vmem>>, vector<1x8x8x8xf32>,
    return
  }
  func.func @transform_0(%arg0: i32) -> (i32, i32, i32, i32) {
    %c0_i32 = arith.constant 0 : i32
    %c0_i32_0 = arith.constant 0 : i32
    %c0_i32_1 = arith.constant 0 : i32
    %c0_i32_2 = arith.constant 0 : i32
    return %arg0, %c0_i32, %c0_i32_0, %c0_i32_1 : i32, i32, i32, i32
  }
  func.func @transform_1(%arg0: i32) -> (i32, i32) {
    %c0_i32 = arith.constant 0 : i32
    %c0_i32_0 = arith.constant 0 : i32
    %c0_i32_1 = arith.constant 0 : i32
    return %c0_i32, %c0_i32_0 : i32, i32
  }
  func.func @transform_2(%arg0: i32) -> (i32, i32) {
    %c0_i32 = arith.constant 0 : i32
    %c0_i32_0 = arith.constant 0 : i32
    %c0_i32_1 = arith.constant 0 : i32
    return %c0_i32, %c0_i32_0 : i32, i32
  }
  func.func @transform_3(%arg0: i32) -> (i32, i32, i32, i32) {
    %c0_i32 = arith.constant 0 : i32
    %c0_i32_0 = arith.constant 0 : i32
    %c0_i32_1 = arith.constant 0 : i32
    %c0_i32_2 = arith.constant 0 : i32
    return %arg0, %c0_i32, %c0_i32_0, %c0_i32_1 : i32, i32, i32, i32
  }
}

module attributes {stable_mosaic.version = 11 : i64} {
  func.func @_pool_conv_stats_kernel(%arg0: i32, %arg1: memref<1x16x8x8xf32, #tpu.memory_space<vmem>>, %arg2: memref<36x8xbf16, #tpu.memory_space<vmem>>, %arg3: memref<1x8x8x8xf32, #tpu.memory_space<vmem>>, %arg4: memref<2x8xf32, #tpu.memory_space<vmem>>, %arg5: memref<10x10x4xbf16, #tpu.memory_space<vmem>>) attributes {dimension_semantics = [#tpu.dimension_semantics<arbitrary>], iteration_bounds = array<i64: 2>, scalar_prefetch = 0 : i64, scratch_operands = 1 : i64, tpu.core_type = #tpu.core_type<tc>, window_params = [{transform_indices = @transform_0, window_bounds = array<i64: 1, 16, 8, 8>}, {pipeline_mode = #tpu.pipeline_mode<synchronous>, transform_indices = @transform_1, window_bounds = array<i64: 36, 8>}, {transform_indices = @transform_2, window_bounds = array<i64: 1, 8, 8, 8>}, {pipeline_mode = #tpu.pipeline_mode<synchronous>, transform_indices = @transform_3, window_bounds = array<i64: 2, 8>}]} {
    %c0 = arith.constant 0 : index
    %c0_0 = arith.constant 0 : index
    %c0_1 = arith.constant 0 : index
    %c0_2 = arith.constant 0 : index
    %0 = vector.load %arg1[%c0, %c0_0, %c0_1, %c0_2] : memref<1x16x8x8xf32, #tpu.memory_space<vmem>>, vector<1x16x8x8xf32>
    %1 = vector.shape_cast %0 : vector<1x16x8x8xf32> to vector<16x8x8xf32>
    %2 = vector.extract_strided_slice %1 {offsets = [0, 0, 0], sizes = [16, 8, 4], strides = [1, 1, 1]} : vector<16x8x8xf32> to vector<16x8x4xf32>
    %3 = vector.extract_strided_slice %1 {offsets = [0, 0, 4], sizes = [16, 8, 4], strides = [1, 1, 1]} : vector<16x8x8xf32> to vector<16x8x4xf32>
    %4 = arith.maximumf %2, %3 : vector<16x8x4xf32>
    %5 = vector.shape_cast %4 : vector<16x8x4xf32> to vector<8x2x8x4xf32>
    %6 = vector.extract_strided_slice %5 {offsets = [0, 0, 0, 0], sizes = [8, 1, 8, 4], strides = [1, 1, 1, 1]} : vector<8x2x8x4xf32> to vector<8x1x8x4xf32>
    %7 = vector.shape_cast %6 : vector<8x1x8x4xf32> to vector<8x8x4xf32>
    %8 = vector.extract_strided_slice %5 {offsets = [0, 1, 0, 0], sizes = [8, 1, 8, 4], strides = [1, 1, 1, 1]} : vector<8x2x8x4xf32> to vector<8x1x8x4xf32>
    %9 = vector.shape_cast %8 : vector<8x1x8x4xf32> to vector<8x8x4xf32>
    %10 = arith.maximumf %7, %9 : vector<8x8x4xf32>
    %cst = arith.constant 0.000000e+00 : bf16
    %11 = vector.broadcast %cst : bf16 to vector<10x10x4xbf16>
    %c0_3 = arith.constant 0 : index
    %c0_4 = arith.constant 0 : index
    %c0_5 = arith.constant 0 : index
    %12 = vector.load %arg5[%c0_3, %c0_4, %c0_5] : memref<10x10x4xbf16, #tpu.memory_space<vmem>>, vector<10x10x4xbf16>
    tpu.vector_store %arg5[%c0_3, %c0_4, %c0_5], %11 {strides = array<i32>} : memref<10x10x4xbf16, #tpu.memory_space<vmem>>, vector<10x10x4xbf16>,
    %13 = arith.truncf %10 : vector<8x8x4xf32> to vector<8x8x4xbf16>
    %c1 = arith.constant 1 : index
    %c1_6 = arith.constant 1 : index
    %c0_7 = arith.constant 0 : index
    %14 = vector.load %arg5[%c1, %c1_6, %c0_7] : memref<10x10x4xbf16, #tpu.memory_space<vmem>>, vector<8x8x4xbf16>
    tpu.vector_store %arg5[%c1, %c1_6, %c0_7], %13 {strides = array<i32>} : memref<10x10x4xbf16, #tpu.memory_space<vmem>>, vector<8x8x4xbf16>,
    %c0_8 = arith.constant 0 : index
    %c0_9 = arith.constant 0 : index
    %c0_10 = arith.constant 0 : index
    %15 = vector.load %arg5[%c0_8, %c0_9, %c0_10] : memref<10x10x4xbf16, #tpu.memory_space<vmem>>, vector<8x8x4xbf16>
    %c0_11 = arith.constant 0 : index
    %c1_12 = arith.constant 1 : index
    %c0_13 = arith.constant 0 : index
    %16 = vector.load %arg5[%c0_11, %c1_12, %c0_13] : memref<10x10x4xbf16, #tpu.memory_space<vmem>>, vector<8x8x4xbf16>
    %c0_14 = arith.constant 0 : index
    %c2 = arith.constant 2 : index
    %c0_15 = arith.constant 0 : index
    %17 = vector.load %arg5[%c0_14, %c2, %c0_15] : memref<10x10x4xbf16, #tpu.memory_space<vmem>>, vector<8x8x4xbf16>
    %c1_16 = arith.constant 1 : index
    %c0_17 = arith.constant 0 : index
    %c0_18 = arith.constant 0 : index
    %18 = vector.load %arg5[%c1_16, %c0_17, %c0_18] : memref<10x10x4xbf16, #tpu.memory_space<vmem>>, vector<8x8x4xbf16>
    %c1_19 = arith.constant 1 : index
    %c1_20 = arith.constant 1 : index
    %c0_21 = arith.constant 0 : index
    %19 = vector.load %arg5[%c1_19, %c1_20, %c0_21] : memref<10x10x4xbf16, #tpu.memory_space<vmem>>, vector<8x8x4xbf16>
    %c1_22 = arith.constant 1 : index
    %c2_23 = arith.constant 2 : index
    %c0_24 = arith.constant 0 : index
    %20 = vector.load %arg5[%c1_22, %c2_23, %c0_24] : memref<10x10x4xbf16, #tpu.memory_space<vmem>>, vector<8x8x4xbf16>
    %c2_25 = arith.constant 2 : index
    %c0_26 = arith.constant 0 : index
    %c0_27 = arith.constant 0 : index
    %21 = vector.load %arg5[%c2_25, %c0_26, %c0_27] : memref<10x10x4xbf16, #tpu.memory_space<vmem>>, vector<8x8x4xbf16>
    %c2_28 = arith.constant 2 : index
    %c1_29 = arith.constant 1 : index
    %c0_30 = arith.constant 0 : index
    %22 = vector.load %arg5[%c2_28, %c1_29, %c0_30] : memref<10x10x4xbf16, #tpu.memory_space<vmem>>, vector<8x8x4xbf16>
    %c2_31 = arith.constant 2 : index
    %c2_32 = arith.constant 2 : index
    %c0_33 = arith.constant 0 : index
    %23 = vector.load %arg5[%c2_31, %c2_32, %c0_33] : memref<10x10x4xbf16, #tpu.memory_space<vmem>>, vector<8x8x4xbf16>
    %24 = tpu.concatenate %15, %16, %17, %18, %19, %20, %21, %22, %23 in 2 : vector<8x8x4xbf16>, vector<8x8x4xbf16>, vector<8x8x4xbf16>, vector<8x8x4xbf16>, vector<8x8x4xbf16>, vector<8x8x4xbf16>, vector<8x8x4xbf16>, vector<8x8x4xbf16>, vector<8x8x4xbf16> -> vector<8x8x36xbf16>
    %25 = vector.shape_cast %24 : vector<8x8x36xbf16> to vector<64x36xbf16>
    %c0_34 = arith.constant 0 : index
    %c0_35 = arith.constant 0 : index
    %26 = vector.load %arg2[%c0_34, %c0_35] : memref<36x8xbf16, #tpu.memory_space<vmem>>, vector<36x8xbf16>
    %cst_36 = arith.constant dense<0.000000e+00> : vector<64x8xf32>
    %27 = tpu.matmul %25, %26, %cst_36 {dimension_numbers = #tpu.dot_dimension_numbers<[1], [0], [0], [1], [0, 0, 1, 1], [], []>} : vector<64x36xbf16>, vector<36x8xbf16>, vector<64x8xf32> -> vector<64x8xf32>
    %28 = vector.shape_cast %27 : vector<64x8xf32> to vector<8x8x8xf32>
    %c0_37 = arith.constant 0 : index
    %c0_38 = arith.constant 0 : index
    %c0_39 = arith.constant 0 : index
    %c0_40 = arith.constant 0 : index
    %29 = vector.load %arg3[%c0_37, %c0_38, %c0_39, %c0_40] : memref<1x8x8x8xf32, #tpu.memory_space<vmem>>, vector<1x8x8x8xf32>
    %30 = vector.shape_cast %29 : vector<1x8x8x8xf32> to vector<8x8x8xf32>
    %31 = vector.shape_cast %28 : vector<8x8x8xf32> to vector<1x8x8x8xf32>
    tpu.vector_store %arg3[%c0_37, %c0_38, %c0_39, %c0_40], %31 {strides = array<i32>} : memref<1x8x8x8xf32, #tpu.memory_space<vmem>>, vector<1x8x8x8xf32>,
    %cst_41 = arith.constant dense<0.000000e+00> : vector<8xf32>
    %32 = vector.multi_reduction <add>, %27, %cst_41 [0] : vector<64x8xf32> to vector<8xf32>
    %33 = vector.shape_cast %32 : vector<8xf32> to vector<1x8xf32>
    %34 = arith.mulf %27, %27 : vector<64x8xf32>
    %cst_42 = arith.constant dense<0.000000e+00> : vector<8xf32>
    %35 = vector.multi_reduction <add>, %34, %cst_42 [0] : vector<64x8xf32> to vector<8xf32>
    %36 = vector.shape_cast %35 : vector<8xf32> to vector<1x8xf32>
    %37 = tpu.concatenate %33, %36 in 0 : vector<1x8xf32>, vector<1x8xf32> -> vector<2x8xf32>
    %c0_i32 = arith.constant 0 : i32
    %38 = arith.cmpi eq, %arg0, %c0_i32 : i32
    %39 = arith.extui %38 : i1 to i32
    %c0_i32_43 = arith.constant 0 : i32
    %40 = arith.cmpi ne, %39, %c0_i32_43 : i32
    scf.if %40 {
      %c0_46 = arith.constant 0 : index
      %c0_47 = arith.constant 0 : index
      %44 = vector.load %arg4[%c0_46, %c0_47] : memref<2x8xf32, #tpu.memory_space<vmem>>, vector<2x8xf32>
      tpu.vector_store %arg4[%c0_46, %c0_47], %37 {strides = array<i32>} : memref<2x8xf32, #tpu.memory_space<vmem>>, vector<2x8xf32>,
    } else {
    }
    %c0_i32_44 = arith.constant 0 : i32
    %41 = arith.cmpi ne, %arg0, %c0_i32_44 : i32
    %42 = arith.extui %41 : i1 to i32
    %c0_i32_45 = arith.constant 0 : i32
    %43 = arith.cmpi ne, %42, %c0_i32_45 : i32
    scf.if %43 {
      %c0_46 = arith.constant 0 : index
      %c0_47 = arith.constant 0 : index
      %44 = vector.load %arg4[%c0_46, %c0_47] : memref<2x8xf32, #tpu.memory_space<vmem>>, vector<2x8xf32>
      %45 = arith.addf %44, %37 : vector<2x8xf32>
      %c0_48 = arith.constant 0 : index
      %c0_49 = arith.constant 0 : index
      %46 = vector.load %arg4[%c0_48, %c0_49] : memref<2x8xf32, #tpu.memory_space<vmem>>, vector<2x8xf32>
      tpu.vector_store %arg4[%c0_48, %c0_49], %45 {strides = array<i32>} : memref<2x8xf32, #tpu.memory_space<vmem>>, vector<2x8xf32>,
    } else {
    }
    return
  }
  func.func @transform_0(%arg0: i32) -> (i32, i32, i32, i32) {
    %c0_i32 = arith.constant 0 : i32
    %c0_i32_0 = arith.constant 0 : i32
    %c0_i32_1 = arith.constant 0 : i32
    %c0_i32_2 = arith.constant 0 : i32
    return %arg0, %c0_i32, %c0_i32_0, %c0_i32_1 : i32, i32, i32, i32
  }
  func.func @transform_1(%arg0: i32) -> (i32, i32) {
    %c0_i32 = arith.constant 0 : i32
    %c0_i32_0 = arith.constant 0 : i32
    %c0_i32_1 = arith.constant 0 : i32
    return %c0_i32, %c0_i32_0 : i32, i32
  }
  func.func @transform_2(%arg0: i32) -> (i32, i32, i32, i32) {
    %c0_i32 = arith.constant 0 : i32
    %c0_i32_0 = arith.constant 0 : i32
    %c0_i32_1 = arith.constant 0 : i32
    %c0_i32_2 = arith.constant 0 : i32
    return %arg0, %c0_i32, %c0_i32_0, %c0_i32_1 : i32, i32, i32, i32
  }
  func.func @transform_3(%arg0: i32) -> (i32, i32) {
    %c0_i32 = arith.constant 0 : i32
    %c0_i32_0 = arith.constant 0 : i32
    %c0_i32_1 = arith.constant 0 : i32
    return %c0_i32, %c0_i32_0 : i32, i32
  }
}

module attributes {stable_mosaic.version = 11 : i64} {
  func.func @_bn_relu_conv_stats_kernel(%arg0: i32, %arg1: memref<1x8x8x8xf32, #tpu.memory_space<vmem>>, %arg2: memref<1x8xf32, #tpu.memory_space<vmem>>, %arg3: memref<1x8xf32, #tpu.memory_space<vmem>>, %arg4: memref<72x8xbf16, #tpu.memory_space<vmem>>, %arg5: memref<1x8x8x8xf32, #tpu.memory_space<vmem>>, %arg6: memref<2x8xf32, #tpu.memory_space<vmem>>, %arg7: memref<10x10x8xbf16, #tpu.memory_space<vmem>>) attributes {dimension_semantics = [#tpu.dimension_semantics<arbitrary>], iteration_bounds = array<i64: 2>, scalar_prefetch = 0 : i64, scratch_operands = 1 : i64, tpu.core_type = #tpu.core_type<tc>, window_params = [{transform_indices = @transform_0, window_bounds = array<i64: 1, 8, 8, 8>}, {pipeline_mode = #tpu.pipeline_mode<synchronous>, transform_indices = @transform_1, window_bounds = array<i64: 1, 8>}, {pipeline_mode = #tpu.pipeline_mode<synchronous>, transform_indices = @transform_2, window_bounds = array<i64: 1, 8>}, {pipeline_mode = #tpu.pipeline_mode<synchronous>, transform_indices = @transform_3, window_bounds = array<i64: 72, 8>}, {transform_indices = @transform_4, window_bounds = array<i64: 1, 8, 8, 8>}, {pipeline_mode = #tpu.pipeline_mode<synchronous>, transform_indices = @transform_5, window_bounds = array<i64: 2, 8>}]} {
    %c0 = arith.constant 0 : index
    %c0_0 = arith.constant 0 : index
    %c0_1 = arith.constant 0 : index
    %c0_2 = arith.constant 0 : index
    %0 = vector.load %arg1[%c0, %c0_0, %c0_1, %c0_2] : memref<1x8x8x8xf32, #tpu.memory_space<vmem>>, vector<1x8x8x8xf32>
    %1 = vector.shape_cast %0 : vector<1x8x8x8xf32> to vector<8x8x8xf32>
    %c0_3 = arith.constant 0 : index
    %c0_4 = arith.constant 0 : index
    %2 = vector.load %arg2[%c0_3, %c0_4] : memref<1x8xf32, #tpu.memory_space<vmem>>, vector<1x8xf32>
    %3 = vector.shape_cast %2 : vector<1x8xf32> to vector<8xf32>
    %4 = vector.shape_cast %3 : vector<8xf32> to vector<1x1x8xf32>
    %5 = vector.broadcast %4 : vector<1x1x8xf32> to vector<8x8x8xf32>
    %6 = arith.mulf %1, %5 : vector<8x8x8xf32>
    %c0_5 = arith.constant 0 : index
    %c0_6 = arith.constant 0 : index
    %7 = vector.load %arg3[%c0_5, %c0_6] : memref<1x8xf32, #tpu.memory_space<vmem>>, vector<1x8xf32>
    %8 = vector.shape_cast %7 : vector<1x8xf32> to vector<8xf32>
    %9 = vector.shape_cast %8 : vector<8xf32> to vector<1x1x8xf32>
    %10 = vector.broadcast %9 : vector<1x1x8xf32> to vector<8x8x8xf32>
    %11 = arith.addf %6, %10 : vector<8x8x8xf32>
    %cst = arith.constant 0.000000e+00 : f32
    %12 = vector.broadcast %cst : f32 to vector<8x8x8xf32>
    %13 = arith.maximumf %11, %12 : vector<8x8x8xf32>
    %cst_7 = arith.constant 0.000000e+00 : bf16
    %14 = vector.broadcast %cst_7 : bf16 to vector<10x10x8xbf16>
    %c0_8 = arith.constant 0 : index
    %c0_9 = arith.constant 0 : index
    %c0_10 = arith.constant 0 : index
    %15 = vector.load %arg7[%c0_8, %c0_9, %c0_10] : memref<10x10x8xbf16, #tpu.memory_space<vmem>>, vector<10x10x8xbf16>
    tpu.vector_store %arg7[%c0_8, %c0_9, %c0_10], %14 {strides = array<i32>} : memref<10x10x8xbf16, #tpu.memory_space<vmem>>, vector<10x10x8xbf16>,
    %16 = arith.truncf %13 : vector<8x8x8xf32> to vector<8x8x8xbf16>
    %c1 = arith.constant 1 : index
    %c1_11 = arith.constant 1 : index
    %c0_12 = arith.constant 0 : index
    %17 = vector.load %arg7[%c1, %c1_11, %c0_12] : memref<10x10x8xbf16, #tpu.memory_space<vmem>>, vector<8x8x8xbf16>
    tpu.vector_store %arg7[%c1, %c1_11, %c0_12], %16 {strides = array<i32>} : memref<10x10x8xbf16, #tpu.memory_space<vmem>>, vector<8x8x8xbf16>,
    %c0_13 = arith.constant 0 : index
    %c0_14 = arith.constant 0 : index
    %c0_15 = arith.constant 0 : index
    %18 = vector.load %arg7[%c0_13, %c0_14, %c0_15] : memref<10x10x8xbf16, #tpu.memory_space<vmem>>, vector<8x8x8xbf16>
    %c0_16 = arith.constant 0 : index
    %c1_17 = arith.constant 1 : index
    %c0_18 = arith.constant 0 : index
    %19 = vector.load %arg7[%c0_16, %c1_17, %c0_18] : memref<10x10x8xbf16, #tpu.memory_space<vmem>>, vector<8x8x8xbf16>
    %c0_19 = arith.constant 0 : index
    %c2 = arith.constant 2 : index
    %c0_20 = arith.constant 0 : index
    %20 = vector.load %arg7[%c0_19, %c2, %c0_20] : memref<10x10x8xbf16, #tpu.memory_space<vmem>>, vector<8x8x8xbf16>
    %c1_21 = arith.constant 1 : index
    %c0_22 = arith.constant 0 : index
    %c0_23 = arith.constant 0 : index
    %21 = vector.load %arg7[%c1_21, %c0_22, %c0_23] : memref<10x10x8xbf16, #tpu.memory_space<vmem>>, vector<8x8x8xbf16>
    %c1_24 = arith.constant 1 : index
    %c1_25 = arith.constant 1 : index
    %c0_26 = arith.constant 0 : index
    %22 = vector.load %arg7[%c1_24, %c1_25, %c0_26] : memref<10x10x8xbf16, #tpu.memory_space<vmem>>, vector<8x8x8xbf16>
    %c1_27 = arith.constant 1 : index
    %c2_28 = arith.constant 2 : index
    %c0_29 = arith.constant 0 : index
    %23 = vector.load %arg7[%c1_27, %c2_28, %c0_29] : memref<10x10x8xbf16, #tpu.memory_space<vmem>>, vector<8x8x8xbf16>
    %c2_30 = arith.constant 2 : index
    %c0_31 = arith.constant 0 : index
    %c0_32 = arith.constant 0 : index
    %24 = vector.load %arg7[%c2_30, %c0_31, %c0_32] : memref<10x10x8xbf16, #tpu.memory_space<vmem>>, vector<8x8x8xbf16>
    %c2_33 = arith.constant 2 : index
    %c1_34 = arith.constant 1 : index
    %c0_35 = arith.constant 0 : index
    %25 = vector.load %arg7[%c2_33, %c1_34, %c0_35] : memref<10x10x8xbf16, #tpu.memory_space<vmem>>, vector<8x8x8xbf16>
    %c2_36 = arith.constant 2 : index
    %c2_37 = arith.constant 2 : index
    %c0_38 = arith.constant 0 : index
    %26 = vector.load %arg7[%c2_36, %c2_37, %c0_38] : memref<10x10x8xbf16, #tpu.memory_space<vmem>>, vector<8x8x8xbf16>
    %27 = tpu.concatenate %18, %19, %20, %21, %22, %23, %24, %25, %26 in 2 : vector<8x8x8xbf16>, vector<8x8x8xbf16>, vector<8x8x8xbf16>, vector<8x8x8xbf16>, vector<8x8x8xbf16>, vector<8x8x8xbf16>, vector<8x8x8xbf16>, vector<8x8x8xbf16>, vector<8x8x8xbf16> -> vector<8x8x72xbf16>
    %28 = vector.shape_cast %27 : vector<8x8x72xbf16> to vector<64x72xbf16>
    %c0_39 = arith.constant 0 : index
    %c0_40 = arith.constant 0 : index
    %29 = vector.load %arg4[%c0_39, %c0_40] : memref<72x8xbf16, #tpu.memory_space<vmem>>, vector<72x8xbf16>
    %cst_41 = arith.constant dense<0.000000e+00> : vector<64x8xf32>
    %30 = tpu.matmul %28, %29, %cst_41 {dimension_numbers = #tpu.dot_dimension_numbers<[1], [0], [0], [1], [0, 0, 1, 1], [], []>} : vector<64x72xbf16>, vector<72x8xbf16>, vector<64x8xf32> -> vector<64x8xf32>
    %31 = vector.shape_cast %30 : vector<64x8xf32> to vector<8x8x8xf32>
    %c0_42 = arith.constant 0 : index
    %c0_43 = arith.constant 0 : index
    %c0_44 = arith.constant 0 : index
    %c0_45 = arith.constant 0 : index
    %32 = vector.load %arg5[%c0_42, %c0_43, %c0_44, %c0_45] : memref<1x8x8x8xf32, #tpu.memory_space<vmem>>, vector<1x8x8x8xf32>
    %33 = vector.shape_cast %32 : vector<1x8x8x8xf32> to vector<8x8x8xf32>
    %34 = vector.shape_cast %31 : vector<8x8x8xf32> to vector<1x8x8x8xf32>
    tpu.vector_store %arg5[%c0_42, %c0_43, %c0_44, %c0_45], %34 {strides = array<i32>} : memref<1x8x8x8xf32, #tpu.memory_space<vmem>>, vector<1x8x8x8xf32>,
    %cst_46 = arith.constant dense<0.000000e+00> : vector<8xf32>
    %35 = vector.multi_reduction <add>, %30, %cst_46 [0] : vector<64x8xf32> to vector<8xf32>
    %36 = vector.shape_cast %35 : vector<8xf32> to vector<1x8xf32>
    %37 = arith.mulf %30, %30 : vector<64x8xf32>
    %cst_47 = arith.constant dense<0.000000e+00> : vector<8xf32>
    %38 = vector.multi_reduction <add>, %37, %cst_47 [0] : vector<64x8xf32> to vector<8xf32>
    %39 = vector.shape_cast %38 : vector<8xf32> to vector<1x8xf32>
    %40 = tpu.concatenate %36, %39 in 0 : vector<1x8xf32>, vector<1x8xf32> -> vector<2x8xf32>
    %c0_i32 = arith.constant 0 : i32
    %41 = arith.cmpi eq, %arg0, %c0_i32 : i32
    %42 = arith.extui %41 : i1 to i32
    %c0_i32_48 = arith.constant 0 : i32
    %43 = arith.cmpi ne, %42, %c0_i32_48 : i32
    scf.if %43 {
      %c0_51 = arith.constant 0 : index
      %c0_52 = arith.constant 0 : index
      %47 = vector.load %arg6[%c0_51, %c0_52] : memref<2x8xf32, #tpu.memory_space<vmem>>, vector<2x8xf32>
      tpu.vector_store %arg6[%c0_51, %c0_52], %40 {strides = array<i32>} : memref<2x8xf32, #tpu.memory_space<vmem>>, vector<2x8xf32>,
    } else {
    }
    %c0_i32_49 = arith.constant 0 : i32
    %44 = arith.cmpi ne, %arg0, %c0_i32_49 : i32
    %45 = arith.extui %44 : i1 to i32
    %c0_i32_50 = arith.constant 0 : i32
    %46 = arith.cmpi ne, %45, %c0_i32_50 : i32
    scf.if %46 {
      %c0_51 = arith.constant 0 : index
      %c0_52 = arith.constant 0 : index
      %47 = vector.load %arg6[%c0_51, %c0_52] : memref<2x8xf32, #tpu.memory_space<vmem>>, vector<2x8xf32>
      %48 = arith.addf %47, %40 : vector<2x8xf32>
      %c0_53 = arith.constant 0 : index
      %c0_54 = arith.constant 0 : index
      %49 = vector.load %arg6[%c0_53, %c0_54] : memref<2x8xf32, #tpu.memory_space<vmem>>, vector<2x8xf32>
      tpu.vector_store %arg6[%c0_53, %c0_54], %48 {strides = array<i32>} : memref<2x8xf32, #tpu.memory_space<vmem>>, vector<2x8xf32>,
    } else {
    }
    return
  }
  func.func @transform_0(%arg0: i32) -> (i32, i32, i32, i32) {
    %c0_i32 = arith.constant 0 : i32
    %c0_i32_0 = arith.constant 0 : i32
    %c0_i32_1 = arith.constant 0 : i32
    %c0_i32_2 = arith.constant 0 : i32
    return %arg0, %c0_i32, %c0_i32_0, %c0_i32_1 : i32, i32, i32, i32
  }
  func.func @transform_1(%arg0: i32) -> (i32, i32) {
    %c0_i32 = arith.constant 0 : i32
    %c0_i32_0 = arith.constant 0 : i32
    %c0_i32_1 = arith.constant 0 : i32
    return %c0_i32, %c0_i32_0 : i32, i32
  }
  func.func @transform_2(%arg0: i32) -> (i32, i32) {
    %c0_i32 = arith.constant 0 : i32
    %c0_i32_0 = arith.constant 0 : i32
    %c0_i32_1 = arith.constant 0 : i32
    return %c0_i32, %c0_i32_0 : i32, i32
  }
  func.func @transform_3(%arg0: i32) -> (i32, i32) {
    %c0_i32 = arith.constant 0 : i32
    %c0_i32_0 = arith.constant 0 : i32
    %c0_i32_1 = arith.constant 0 : i32
    return %c0_i32, %c0_i32_0 : i32, i32
  }
  func.func @transform_4(%arg0: i32) -> (i32, i32, i32, i32) {
    %c0_i32 = arith.constant 0 : i32
    %c0_i32_0 = arith.constant 0 : i32
    %c0_i32_1 = arith.constant 0 : i32
    %c0_i32_2 = arith.constant 0 : i32
    return %arg0, %c0_i32, %c0_i32_0, %c0_i32_1 : i32, i32, i32, i32
  }
  func.func @transform_5(%arg0: i32) -> (i32, i32) {
    %c0_i32 = arith.constant 0 : i32
    %c0_i32_0 = arith.constant 0 : i32
    %c0_i32_1 = arith.constant 0 : i32
    return %c0_i32, %c0_i32_0 : i32, i32
  }
}

</mosaic_0001>

<llo_original>
// kernel: unet_downsample.5
$region0: #{unet_downsample.5}
  #allocation0 [shape = 'u32[]', space=smem, size = 0x4, offset = 0x4, fixed_abs, tag = 'smem constant byte address 0x4 - core index']
  #allocation1 [shape = 'u32[144,128]{1,0:T(1,128)}', space=vmem, size = 0x12000, scoped, tag = 'internal scratch']
  %s0 = inlined_call_operand.vmem [shape: f32[2,8,8,8], index: 0, kind: input, shape index: {}]
  %s1 = inlined_call_operand.vmem [shape: f32[1,8], index: 1, kind: input, shape index: {}]
  %s2 = inlined_call_operand.vmem [shape: f32[1,8], index: 2, kind: input, shape index: {}]
  %s3 = inlined_call_operand.hbm [shape: f32[2,8,8,8], index: 3, kind: output, shape index: {}]
  %s4 = sld [smem:[#allocation0]]
  $region45: #{unet_downsample.5} parent=0
    _
  %s6 = ssub.s32 1, %s4
  %s7 = scalar_select 0, %s6, %s4
  $region1: #{unet_downsample.5} parent=0
    #allocation2 [shape = 'u8[65536]{0}', space=vmem, size = 0x10000, scoped, tag = 'output window, operand 0']
    #allocation3 [shape = 's32[2]{0}', space=sflag, size = 0x8, scoped, tag = 'scoped memory for unet_downsample.5']
    %8 = vsyncpa [#allocation3], 0
    %s9 = scalar_lea.sflag [#allocation3], 1
    %10 = vsyncpa %s9, 0
    loop: start=0, step=1, limit=4
    $region2: #{unet_downsample.5} parent=1 // loop_pre_header
      _
    $region3: #{unet_downsample.5} parent=1 // loop_header
      %s12 = sphi 0, %s16
      %p13 = scmp.ge.s32.totalorder %s12, 4
      %s22 = sphi 0, %s24
      %s25 = sphi 0, %s22
      %s26 = sphi 0, %s25
      %s42 = sphi 0, %s26
      %s46 = sphi 0, %s46
      %s48 = sphi 0, %s46
      %s49 = sphi 0, %s48
      %s63 = sphi 0, %s49
      %s67 = sphi 0, %s67
      %s69 = sphi 0, %s67
      %s70 = sphi 0, %s69
      %s84 = sphi 0, %s70
      %s90 = sphi 0, %s92
      %s93 = sphi 0, %s90
      %s94 = sphi 0, %s93
      %s110 = sphi 0, %s94
    $region4: #{unet_downsample.5} parent=1 // loop_header_branch
      %15 = sbr.rel (%p13) target = $region8
    $region5: #{unet_downsample.5} parent=1 // loop_body
      %s17 = ssub.s32 %s12, 1
      %s18 = ssub.s32 %s12, 2
      %s19 = sadd.s32 %s12, 1
      %s20 = ssub.s32 %s12, %s19
      %p21 = scmp.eq.s32.totalorder %s20, 0
      %s23 = sadd.s32 %s22, 1
      %s24 = scalar_select %p21, %s22, %s23
      %p27 = pneg %p21
      %p28 = scmp.eq.s32.totalorder %s12, 1
      %p29 = por %p27, %p28
      %p30 = scmp.ne.s32.totalorder %s22, %s25
      %p31 = scmp.eq.s32.totalorder %s12, 0
      %p32 = por %p30, %p31
      %p33 = scmp.ne.s32.totalorder %s22, %s25
      %p34 = scmp.eq.s32.totalorder %s17, 1
      %p35 = por %p33, %p34
      %p36 = scmp.ne.s32.totalorder %s25, %s26
      %p37 = scmp.eq.s32.totalorder %s17, 0
      %p38 = por %p36, %p37
      %p39 = scmp.ne.s32.totalorder %s25, %s26
      %p40 = scmp.eq.s32.totalorder %s18, 1
      %p41 = por %p39, %p40
      %p43 = scmp.ne.s32.totalorder %s26, %s42
      %p44 = scmp.eq.s32.totalorder %s18, 0
      %p45 = por %p43, %p44
      %s47 = sadd.s32 %s46, 1
      %p50 = scmp.eq.s32.totalorder %s12, 1
      %p51 = scmp.ne.s32.totalorder %s46, %s48
      %p52 = scmp.eq.s32.totalorder %s12, 0
      %p53 = por %p51, %p52
      %p54 = scmp.ne.s32.totalorder %s46, %s48
      %p55 = scmp.eq.s32.totalorder %s17, 1
      %p56 = por %p54, %p55
      %p57 = scmp.ne.s32.totalorder %s48, %s49
      %p58 = scmp.eq.s32.totalorder %s17, 0
      %p59 = por %p57, %p58
      %p60 = scmp.ne.s32.totalorder %s48, %s49
      %p61 = scmp.eq.s32.totalorder %s18, 1
      %p62 = por %p60, %p61
      %p64 = scmp.ne.s32.totalorder %s49, %s63
      %p65 = scmp.eq.s32.totalorder %s18, 0
      %p66 = por %p64, %p65
      %s68 = sadd.s32 %s67, 1
      %p71 = scmp.eq.s32.totalorder %s12, 1
      %p72 = scmp.ne.s32.totalorder %s67, %s69
      %p73 = scmp.eq.s32.totalorder %s12, 0
      %p74 = por %p72, %p73
      %p75 = scmp.ne.s32.totalorder %s67, %s69
      %p76 = scmp.eq.s32.totalorder %s17, 1
      %p77 = por %p75, %p76
      %p78 = scmp.ne.s32.totalorder %s69, %s70
      %p79 = scmp.eq.s32.totalorder %s17, 0
      %p80 = por %p78, %p79
      %p81 = scmp.ne.s32.totalorder %s69, %s70
      %p82 = scmp.eq.s32.totalorder %s18, 1
      %p83 = por %p81, %p82
      %p85 = scmp.ne.s32.totalorder %s70, %s84
      %p86 = scmp.eq.s32.totalorder %s18, 0
      %p87 = por %p85, %p86
      %s88 = ssub.s32 %s12, %s19
      %p89 = scmp.eq.s32.totalorder %s88, 0
      %s91 = sadd.s32 %s90, 1
      %s92 = scalar_select %p89, %s90, %s91
      %p95 = pneg %p89
      %p96 = scmp.eq.s32.totalorder %s12, 1
      %p97 = por %p95, %p96
      %p98 = scmp.ne.s32.totalorder %s90, %s93
      %p99 = scmp.eq.s32.totalorder %s12, 0
      %p100 = por %p98, %p99
      %p101 = scmp.ne.s32.totalorder %s90, %s93
      %p102 = scmp.eq.s32.totalorder %s17, 1
      %p103 = por %p101, %p102
      %p104 = scmp.ne.s32.totalorder %s93, %s94
      %p105 = scmp.eq.s32.totalorder %s17, 0
      %p106 = por %p104, %p105
      %p107 = scmp.ne.s32.totalorder %s93, %s94
      %p108 = scmp.eq.s32.totalorder %s18, 1
      %p109 = por %p107, %p108
      %p111 = scmp.ne.s32.totalorder %s94, %s110
      %p112 = scmp.eq.s32.totalorder %s18, 0
      %p113 = por %p111, %p112
      %p114 = scmp.le.s32.totalorder 1, %s12
      %p115 = scmp.lt.s32.totalorder %s12, 3
      %p116 = pnand %p114, %p115
      %p117 = pneg %p116
      // Predicated region
      $region9: #{unet_downsample.5} parent=5 // pred_check
        _
      $region10: #{unet_downsample.5} parent=5 // pred_check_branch
        %119 = sbr.rel (%p116) target = $region12
      $region11: #{unet_downsample.5} parent=5 // pred_region
        %s120 = ssub.s32 %s12, 1
        // Predicated region
        $region13: #{unet_downsample.5} parent=11 // pred_check
          %p121 = pneg %p59
        $region14: #{unet_downsample.5} parent=11 // pred_check_branch
          %123 = sbr.rel (%p121) target = $region16
        $region15: #{unet_downsample.5} parent=11 // pred_region
          _
        $region16: #{unet_downsample.5} parent=11 // pred_fallthru
          _
        // Predicated region
        $region17: #{unet_downsample.5} parent=11 // pred_check
          %p124 = pneg %p80
        $region18: #{unet_downsample.5} parent=11 // pred_check_branch
          %126 = sbr.rel (%p124) target = $region20
        $region19: #{unet_downsample.5} parent=11 // pred_region
          _
        $region20: #{unet_downsample.5} parent=11 // pred_fallthru
          _
      $region12: #{unet_downsample.5} parent=5 // pred_fallthru
        _
      %p127 = scmp.lt.s32.totalorder %s12, 2
      // Predicated region
      $region21: #{unet_downsample.5} parent=5 // pred_check
        %p128 = pneg %p127
      $region22: #{unet_downsample.5} parent=5 // pred_check_branch
        %130 = sbr.rel (%p128) target = $region24
      $region23: #{unet_downsample.5} parent=5 // pred_region
        // Predicated region
        $region25: #{unet_downsample.5} parent=23 // pred_check
          %p131 = pneg %p32
        $region26: #{unet_downsample.5} parent=23 // pred_check_branch
          %133 = sbr.rel (%p131) target = $region28
        $region27: #{unet_downsample.5} parent=23 // pred_region
          %p134 = scmp.lt.s32.totalorder %s12, 1
          %s135 = scalar_select %p134, %s12, 1
          %s136 = smul.addr %s135, 8
          %s137 = smul.addr %s136, 8
          %s138 = scalar_lea.vmem %s0, %s137
        $region28: #{unet_downsample.5} parent=23 // pred_fallthru
          _
      $region24: #{unet_downsample.5} parent=5 // pred_fallthru
        _
      %p139 = scmp.le.s32.totalorder 1, %s12
      %p140 = scmp.lt.s32.totalorder %s12, 3
      %p141 = pnand %p139, %p140
      %p142 = pneg %p141
      // Predicated region
      $region29: #{unet_downsample.5} parent=5 // pred_check
        _
      $region30: #{unet_downsample.5} parent=5 // pred_check_branch
        %144 = sbr.rel (%p141) target = $region32
      $region31: #{unet_downsample.5} parent=5 // pred_region
        %s145 = ssub.s32 %s12, 1
        %p146 = scmp.lt.s32.totalorder %s17, 1
        %s147 = scalar_select %p146, %s17, 1
        %s148 = smul.addr %s147, 8
        %s149 = smul.addr %s148, 8
        %s150 = scalar_lea.vmem %s0, %s149
        %p151 = pneg %p38
        %p152 = pneg %p35
        %p153 = pneg %p59
        %p154 = pneg %p56
        %p155 = pneg %p80
        %p156 = pneg %p77
        %p157 = pneg %p106
        %p158 = pneg %p103
        %s159 = sand.u32 %s93, 1
        %s160 = scalar_lea.sflag [#allocation3], %s159
        %s161 = sand.u32 %s93, 1
        %s162 = smul.addr %s161, 64
        %s163 = scalar_lea.vmem [#allocation2], %s162
        %p164 = scmp.lt.s32.totalorder %s17, 1
        %s165 = scalar_select %p164, %s17, 1
        %s166 = smul.addr %s165, 8
        %s167 = smul.addr %s166, 8
        %s168 = scalar_lea.vmem %s0, %s167
        %v169 = vld [vmem:[%s168] sm:$0xff]
        %v170 = vld [vmem:[%s168 + $0x8] sm:$0xff]
        %v171 = vld [vmem:[%s168 + $0x10] sm:$0xff]
        %v172 = vld [vmem:[%s168 + $0x18] sm:$0xff]
        %v173 = vld [vmem:[%s168 + $0x20] sm:$0xff]
        %v174 = vld [vmem:[%s168 + $0x28] sm:$0xff]
        %v175 = vld [vmem:[%s168 + $0x30] sm:$0xff]
        %v176 = vld [vmem:[%s168 + $0x38] sm:$0xff]
        %v177 = vld [vmem:[%s1] sm:$0x1]
        %v179 = vlaneseq
        %v180 = vshrl.u32 %v179, 7
        %v181 = vsub.s32 0, %v180
        %v182 = vrot.slane %v177, %v181
        %v184 = vmul.f32 %v169, %v182
        %v185 = vmul.f32 %v170, %v182
        %v186 = vmul.f32 %v171, %v182
        %v187 = vmul.f32 %v172, %v182
        %v188 = vmul.f32 %v173, %v182
        %v189 = vmul.f32 %v174, %v182
        %v190 = vmul.f32 %v175, %v182
        %v191 = vmul.f32 %v176, %v182
        %v192 = vld [vmem:[%s2] sm:$0x1]
        %v194 = vlaneseq
        %v195 = vshrl.u32 %v194, 7
        %v196 = vsub.s32 0, %v195
        %v197 = vrot.slane %v192, %v196
        %v199 = vadd.f32 %v184, %v197
        %v200 = vadd.f32 %v185, %v197
        %v201 = vadd.f32 %v186, %v197
        %v202 = vadd.f32 %v187, %v197
        %v203 = vadd.f32 %v188, %v197
        %v204 = vadd.f32 %v189, %v197
        %v205 = vadd.f32 %v190, %v197
        %v206 = vadd.f32 %v191, %v197
        %v207 = vmax.f32 %v199, 0.0
        %v208 = vmax.f32 %v200, 0.0
        %v209 = vmax.f32 %v201, 0.0
        %v210 = vmax.f32 %v202, 0.0
        %v211 = vmax.f32 %v203, 0.0
        %v212 = vmax.f32 %v204, 0.0
        %v213 = vmax.f32 %v205, 0.0
        %v214 = vmax.f32 %v206, 0.0
        %vm215 = vcmask 64512
        %216 = vst.msk [vmem:[%s163] sm:$0xff] %vm215, %v207
        %217 = vst.msk [vmem:[%s163 + $0x8] sm:$0xff] %vm215, %v208
        %218 = vst.msk [vmem:[%s163 + $0x10] sm:$0xff] %vm215, %v209
        %219 = vst.msk [vmem:[%s163 + $0x18] sm:$0xff] %vm215, %v210
        %220 = vst.msk [vmem:[%s163 + $0x20] sm:$0xff] %vm215, %v211
        %221 = vst.msk [vmem:[%s163 + $0x28] sm:$0xff] %vm215, %v212
        %222 = vst.msk [vmem:[%s163 + $0x30] sm:$0xff] %vm215, %v213
        %223 = vst.msk [vmem:[%s163 + $0x38] sm:$0xff] %vm215, %v214
        %s224 = sand.u32 %s93, 1
        %s225 = scalar_lea.sflag [#allocation3], %s224
        %s226 = sand.u32 %s93, 1
        %s227 = smul.addr %s226, 64
        %s228 = scalar_lea.vmem [#allocation2], %s227
        // Predicated region
        $region33: #{unet_downsample.5} parent=31 // pred_check
          %p229 = pneg %p103
        $region34: #{unet_downsample.5} parent=31 // pred_check_branch
          %231 = sbr.rel (%p229) target = $region36
        $region35: #{unet_downsample.5} parent=31 // pred_region
          %s233 = ssub.s32 1024, 1024
          %234 = vsyncadd %s225, %s233
          %s235 = smul.addr %s17, 8
          %s236 = smul.addr %s235, 128
          %s237 = scalar_lea.hbm %s3, %s236
          %s238 = sshll.u32 %s228, 4
          %s239 = int_to_ptr.vmem [resolvable:$true] %s238
          %244 = dma.vmem_to_hbm [thread:$0]  %s239, 1024, %s237, %s225, 128, 128, 8
        $region36: #{unet_downsample.5} parent=31 // pred_fallthru
          _
      $region32: #{unet_downsample.5} parent=5 // pred_fallthru
        _
      %p245 = scmp.le.s32.totalorder 2, %s12
      // Predicated region
      $region37: #{unet_downsample.5} parent=5 // pred_check
        %p246 = pneg %p245
      $region38: #{unet_downsample.5} parent=5 // pred_check_branch
        %248 = sbr.rel (%p246) target = $region40
      $region39: #{unet_downsample.5} parent=5 // pred_region
        %s249 = ssub.s32 %s12, 2
        // Predicated region
        $region41: #{unet_downsample.5} parent=39 // pred_check
          %p250 = pneg %p109
        $region42: #{unet_downsample.5} parent=39 // pred_check_branch
          %252 = sbr.rel (%p250) target = $region44
        $region43: #{unet_downsample.5} parent=39 // pred_region
          %s253 = sand.u32 %s94, 1
          %s254 = scalar_lea.sflag [#allocation3], %s253
          %s255 = sand.u32 %s94, 1
          %s256 = smul.addr %s255, 64
          %s257 = scalar_lea.vmem [#allocation2], %s256
          %258 = dma.done %s254, 1024
        $region44: #{unet_downsample.5} parent=39 // pred_fallthru
          _
      $region40: #{unet_downsample.5} parent=5 // pred_fallthru
        _
    $region6: #{unet_downsample.5} parent=1 // loop_footer
      %s16 = sadd.s32 1, %s12
    $region7: #{unet_downsample.5} parent=1 // loop_footer_branch
      %11 = sbr.rel target = $region3
    $region8: #{unet_downsample.5} parent=1 // loop_exit
      _
    %259 = vsyncpa [#allocation3], 1
    %s260 = scalar_lea.sflag [#allocation3], 1
    %261 = vsyncpa %s260, 1

// kernel: unet_downsample.3
$region0: #{unet_downsample.3}
  #allocation0 [shape = 'u32[]', space=smem, size = 0x4, offset = 0x4, fixed_abs, tag = 'smem constant byte address 0x4 - core index']
  #allocation1 [shape = 'u32[144,128]{1,0:T(1,128)}', space=vmem, size = 0x12000, scoped, tag = 'internal scratch']
  #allocation2 [shape = 'bf16[10,10,4]{2,1,0:T(8,128)(2,1)}', space=vmem, size = 0xa000, scoped, tag = 'scratch operand']
  %s0 = inlined_call_operand.vmem [shape: f32[2,16,8,8], index: 0, kind: input, shape index: {}]
  %s1 = inlined_call_operand.vmem [shape: bf16[36,8], index: 1, kind: input, shape index: {}]
  %s2 = inlined_call_operand.vmem [shape: f32[2,8,8,8], index: 2, kind: output, shape index: {0}]
  %s3 = inlined_call_operand.vmem [shape: f32[2,8], index: 3, kind: output, shape index: {1}]
  %4 = xla_tuple %s2, %s3
  %s5 = sld [smem:[#allocation0]]
  $region57: #{unet_downsample.3} parent=0
    _
  %s7 = ssub.s32 1, %s5
  %s8 = scalar_select 0, %s7, %s5
  loop: start=0, step=1, limit=4
  $region2: #{unet_downsample.3} parent=0 // loop_pre_header
    _
  $region3: #{unet_downsample.3} parent=0 // loop_header
    %s10 = sphi 0, %s14
    %p11 = scmp.ge.s32.totalorder %s10, 4
    %s20 = sphi 0, %s22
    %s23 = sphi 0, %s20
    %s24 = sphi 0, %s23
    %s40 = sphi 0, %s24
    %s44 = sphi 0, %s44
    %s46 = sphi 0, %s44
    %s47 = sphi 0, %s46
    %s61 = sphi 0, %s47
    %s67 = sphi 0, %s69
    %s70 = sphi 0, %s67
    %s71 = sphi 0, %s70
    %s87 = sphi 0, %s71
    %s91 = sphi 0, %s91
    %s93 = sphi 0, %s91
    %s94 = sphi 0, %s93
    %s108 = sphi 0, %s94
  $region4: #{unet_downsample.3} parent=0 // loop_header_branch
    %13 = sbr.rel (%p11) target = $region8
  $region5: #{unet_downsample.3} parent=0 // loop_body
    %s15 = ssub.s32 %s10, 1
    %s16 = ssub.s32 %s10, 2
    %s17 = sadd.s32 %s10, 1
    %s18 = ssub.s32 %s10, %s17
    %p19 = scmp.eq.s32.totalorder %s18, 0
    %s21 = sadd.s32 %s20, 1
    %s22 = scalar_select %p19, %s20, %s21
    %p25 = pneg %p19
    %p26 = scmp.eq.s32.totalorder %s10, 1
    %p27 = por %p25, %p26
    %p28 = scmp.ne.s32.totalorder %s20, %s23
    %p29 = scmp.eq.s32.totalorder %s10, 0
    %p30 = por %p28, %p29
    %p31 = scmp.ne.s32.totalorder %s20, %s23
    %p32 = scmp.eq.s32.totalorder %s15, 1
    %p33 = por %p31, %p32
    %p34 = scmp.ne.s32.totalorder %s23, %s24
    %p35 = scmp.eq.s32.totalorder %s15, 0
    %p36 = por %p34, %p35
    %p37 = scmp.ne.s32.totalorder %s23, %s24
    %p38 = scmp.eq.s32.totalorder %s16, 1
    %p39 = por %p37, %p38
    %p41 = scmp.ne.s32.totalorder %s24, %s40
    %p42 = scmp.eq.s32.totalorder %s16, 0
    %p43 = por %p41, %p42
    %s45 = sadd.s32 %s44, 1
    %p48 = scmp.eq.s32.totalorder %s10, 1
    %p49 = scmp.ne.s32.totalorder %s44, %s46
    %p50 = scmp.eq.s32.totalorder %s10, 0
    %p51 = por %p49, %p50
    %p52 = scmp.ne.s32.totalorder %s44, %s46
    %p53 = scmp.eq.s32.totalorder %s15, 1
    %p54 = por %p52, %p53
    %p55 = scmp.ne.s32.totalorder %s46, %s47
    %p56 = scmp.eq.s32.totalorder %s15, 0
    %p57 = por %p55, %p56
    %p58 = scmp.ne.s32.totalorder %s46, %s47
    %p59 = scmp.eq.s32.totalorder %s16, 1
    %p60 = por %p58, %p59
    %p62 = scmp.ne.s32.totalorder %s47, %s61
    %p63 = scmp.eq.s32.totalorder %s16, 0
    %p64 = por %p62, %p63
    %s65 = ssub.s32 %s10, %s17
    %p66 = scmp.eq.s32.totalorder %s65, 0
    %s68 = sadd.s32 %s67, 1
    %s69 = scalar_select %p66, %s67, %s68
    %p72 = pneg %p66
    %p73 = scmp.eq.s32.totalorder %s10, 1
    %p74 = por %p72, %p73
    %p75 = scmp.ne.s32.totalorder %s67, %s70
    %p76 = scmp.eq.s32.totalorder %s10, 0
    %p77 = por %p75, %p76
    %p78 = scmp.ne.s32.totalorder %s67, %s70
    %p79 = scmp.eq.s32.totalorder %s15, 1
    %p80 = por %p78, %p79
    %p81 = scmp.ne.s32.totalorder %s70, %s71
    %p82 = scmp.eq.s32.totalorder %s15, 0
    %p83 = por %p81, %p82
    %p84 = scmp.ne.s32.totalorder %s70, %s71
    %p85 = scmp.eq.s32.totalorder %s16, 1
    %p86 = por %p84, %p85
    %p88 = scmp.ne.s32.totalorder %s71, %s87
    %p89 = scmp.eq.s32.totalorder %s16, 0
    %p90 = por %p88, %p89
    %s92 = sadd.s32 %s91, 1
    %p95 = scmp.eq.s32.totalorder %s10, 1
    %p96 = scmp.ne.s32.totalorder %s91, %s93
    %p97 = scmp.eq.s32.totalorder %s10, 0
    %p98 = por %p96, %p97
    %p99 = scmp.ne.s32.totalorder %s91, %s93
    %p100 = scmp.eq.s32.totalorder %s15, 1
    %p101 = por %p99, %p100
    %p102 = scmp.ne.s32.totalorder %s93, %s94
    %p103 = scmp.eq.s32.totalorder %s15, 0
    %p104 = por %p102, %p103
    %p105 = scmp.ne.s32.totalorder %s93, %s94
    %p106 = scmp.eq.s32.totalorder %s16, 1
    %p107 = por %p105, %p106
    %p109 = scmp.ne.s32.totalorder %s94, %s108
    %p110 = scmp.eq.s32.totalorder %s16, 0
    %p111 = por %p109, %p110
    %p112 = scmp.le.s32.totalorder 1, %s10
    %p113 = scmp.lt.s32.totalorder %s10, 3
    %p114 = pnand %p112, %p113
    %p115 = pneg %p114
    // Predicated region
    $region9: #{unet_downsample.3} parent=5 // pred_check
      _
    $region10: #{unet_downsample.3} parent=5 // pred_check_branch
      %117 = sbr.rel (%p114) target = $region12
    $region11: #{unet_downsample.3} parent=5 // pred_region
      %s118 = ssub.s32 %s10, 1
      // Predicated region
      $region13: #{unet_downsample.3} parent=11 // pred_check
        %p119 = pneg %p57
      $region14: #{unet_downsample.3} parent=11 // pred_check_branch
        %121 = sbr.rel (%p119) target = $region16
      $region15: #{unet_downsample.3} parent=11 // pred_region
        _
      $region16: #{unet_downsample.3} parent=11 // pred_fallthru
        _
    $region12: #{unet_downsample.3} parent=5 // pred_fallthru
      _
    %p122 = scmp.lt.s32.totalorder %s10, 2
    // Predicated region
    $region17: #{unet_downsample.3} parent=5 // pred_check
      %p123 = pneg %p122
    $region18: #{unet_downsample.3} parent=5 // pred_check_branch
      %125 = sbr.rel (%p123) target = $region20
    $region19: #{unet_downsample.3} parent=5 // pred_region
      // Predicated region
      $region21: #{unet_downsample.3} parent=19 // pred_check
        %p126 = pneg %p30
      $region22: #{unet_downsample.3} parent=19 // pred_check_branch
        %128 = sbr.rel (%p126) target = $region24
      $region23: #{unet_downsample.3} parent=19 // pred_region
        %p129 = scmp.lt.s32.totalorder %s10, 1
        %s130 = scalar_select %p129, %s10, 1
        %s131 = smul.addr %s130, 16
        %s132 = smul.addr %s131, 8
        %s133 = scalar_lea.vmem %s0, %s132
      $region24: #{unet_downsample.3} parent=19 // pred_fallthru
        _
    $region20: #{unet_downsample.3} parent=5 // pred_fallthru
      _
    %p134 = scmp.le.s32.totalorder 1, %s10
    %p135 = scmp.lt.s32.totalorder %s10, 3
    %p136 = pnand %p134, %p135
    %p137 = pneg %p136
    // Predicated region
    $region25: #{unet_downsample.3} parent=5 // pred_check
      _
    $region26: #{unet_downsample.3} parent=5 // pred_check_branch
      %139 = sbr.rel (%p136) target = $region28
    $region27: #{unet_downsample.3} parent=5 // pred_region
      %s140 = ssub.s32 %s10, 1
      %p141 = scmp.lt.s32.totalorder %s15, 1
      %s142 = scalar_select %p141, %s15, 1
      %s143 = smul.addr %s142, 16
      %s144 = smul.addr %s143, 8
      %s145 = scalar_lea.vmem %s0, %s144
      %p146 = pneg %p36
      %p147 = pneg %p33
      %p148 = pneg %p57
      %p149 = pneg %p54
      %p150 = pneg %p83
      %p151 = pneg %p80
      %p152 = scmp.lt.s32.totalorder %s15, 1
      %s153 = scalar_select %p152, %s15, 1
      %s154 = smul.addr %s153, 8
      %s155 = smul.addr %s154, 8
      %s156 = scalar_lea.vmem %s2, %s155
      %p157 = pneg %p104
      %p158 = pneg %p101
      %p159 = scmp.lt.s32.totalorder %s15, 1
      %s160 = scalar_select %p159, %s15, 1
      %s161 = smul.addr %s160, 16
      %s162 = smul.addr %s161, 8
      %s163 = scalar_lea.vmem %s0, %s162
      %p164 = scmp.lt.s32.totalorder %s15, 1
      %s165 = scalar_select %p164, %s15, 1
      %s166 = smul.addr %s165, 8
      %s167 = smul.addr %s166, 8
      %s168 = scalar_lea.vmem %s2, %s167
      %v170 = vld [vmem:[%s163] sm:$0xff]
      %v171 = vld [vmem:[%s163 + $0x8] sm:$0xff]
      %v172 = vld [vmem:[%s163 + $0x10] sm:$0xff]
      %v173 = vld [vmem:[%s163 + $0x18] sm:$0xff]
      %v174 = vld [vmem:[%s163 + $0x20] sm:$0xff]
      %v175 = vld [vmem:[%s163 + $0x28] sm:$0xff]
      %v176 = vld [vmem:[%s163 + $0x30] sm:$0xff]
      %v177 = vld [vmem:[%s163 + $0x38] sm:$0xff]
      %v178 = vld [vmem:[%s163 + $0x40] sm:$0xff]
      %v179 = vld [vmem:[%s163 + $0x48] sm:$0xff]
      %v180 = vld [vmem:[%s163 + $0x50] sm:$0xff]
      %v181 = vld [vmem:[%s163 + $0x58] sm:$0xff]
      %v182 = vld [vmem:[%s163 + $0x60] sm:$0xff]
      %v183 = vld [vmem:[%s163 + $0x68] sm:$0xff]
      %v184 = vld [vmem:[%s163 + $0x70] sm:$0xff]
      %v185 = vld [vmem:[%s163 + $0x78] sm:$0xff]
      %202 = vrot.lane.b32.xlu0 %v170, 124
      %v203 = vpop.permute.xlu0 %202
      %204 = vrot.lane.b32.xlu0 %v171, 124
      %v205 = vpop.permute.xlu0 %204
      %206 = vrot.lane.b32.xlu0 %v172, 124
      %v207 = vpop.permute.xlu0 %206
      %208 = vrot.lane.b32.xlu0 %v173, 124
      %v209 = vpop.permute.xlu0 %208
      %210 = vrot.lane.b32.xlu0 %v174, 124
      %v211 = vpop.permute.xlu0 %210
      %212 = vrot.lane.b32.xlu0 %v175, 124
      %v213 = vpop.permute.xlu0 %212
      %214 = vrot.lane.b32.xlu0 %v176, 124
      %v215 = vpop.permute.xlu0 %214
      %216 = vrot.lane.b32.xlu0 %v177, 124
      %v217 = vpop.permute.xlu0 %216
      %218 = vrot.lane.b32.xlu0 %v178, 124
      %v219 = vpop.permute.xlu0 %218
      %220 = vrot.lane.b32.xlu0 %v179, 124
      %v221 = vpop.permute.xlu0 %220
      %222 = vrot.lane.b32.xlu0 %v180, 124
      %v223 = vpop.permute.xlu0 %222
      %224 = vrot.lane.b32.xlu0 %v181, 124
      %v225 = vpop.permute.xlu0 %224
      %226 = vrot.lane.b32.xlu0 %v182, 124
      %v227 = vpop.permute.xlu0 %226
      %228 = vrot.lane.b32.xlu0 %v183, 124
      %v229 = vpop.permute.xlu0 %228
      %230 = vrot.lane.b32.xlu0 %v184, 124
      %v231 = vpop.permute.xlu0 %230
      %232 = vrot.lane.b32.xlu0 %v185, 124
      %v233 = vpop.permute.xlu0 %232
      %v250 = vmax.f32 %v170, %v203
      %v251 = vmax.f32 %v171, %v205
      %v252 = vmax.f32 %v172, %v207
      %v253 = vmax.f32 %v173, %v209
      %v254 = vmax.f32 %v174, %v211
      %v255 = vmax.f32 %v175, %v213
      %v256 = vmax.f32 %v176, %v215
      %v257 = vmax.f32 %v177, %v217
      %v258 = vmax.f32 %v178, %v219
      %v259 = vmax.f32 %v179, %v221
      %v260 = vmax.f32 %v180, %v223
      %v261 = vmax.f32 %v181, %v225
      %v262 = vmax.f32 %v182, %v227
      %v263 = vmax.f32 %v183, %v229
      %v264 = vmax.f32 %v184, %v231
      %v265 = vmax.f32 %v185, %v233
      %v266 = vmax.f32 %v250, %v251
      %v267 = vmax.f32 %v252, %v253
      %v268 = vmax.f32 %v254, %v255
      %v269 = vmax.f32 %v256, %v257
      %v270 = vmax.f32 %v258, %v259
      %v271 = vmax.f32 %v260, %v261
      %v272 = vmax.f32 %v262, %v263
      %v273 = vmax.f32 %v264, %v265
      %vm274 = vcmask 27648
      %275 = vst.msk [vmem:[#allocation2] sm:$0xf] %vm274, 0
      %vm276 = vcmask 24576
      %277 = vst.msk [vmem:[#allocation2 + $0x4] sm:$0x1] %vm276, 0
      %278 = vst.msk [vmem:[#allocation2 + $0x8] sm:$0xf] %vm274, 0
      %279 = vst.msk [vmem:[#allocation2 + $0xc] sm:$0x1] %vm276, 0
      %280 = vst.msk [vmem:[#allocation2 + $0x10] sm:$0xf] %vm274, 0
      %281 = vst.msk [vmem:[#allocation2 + $0x14] sm:$0x1] %vm276, 0
      %282 = vst.msk [vmem:[#allocation2 + $0x18] sm:$0xf] %vm274, 0
      %283 = vst.msk [vmem:[#allocation2 + $0x1c] sm:$0x1] %vm276, 0
      %284 = vst.msk [vmem:[#allocation2 + $0x20] sm:$0xf] %vm274, 0
      %285 = vst.msk [vmem:[#allocation2 + $0x24] sm:$0x1] %vm276, 0
      %286 = vst.msk [vmem:[#allocation2 + $0x28] sm:$0xf] %vm274, 0
      %287 = vst.msk [vmem:[#allocation2 + $0x2c] sm:$0x1] %vm276, 0
      %288 = vst.msk [vmem:[#allocation2 + $0x30] sm:$0xf] %vm274, 0
      %289 = vst.msk [vmem:[#allocation2 + $0x34] sm:$0x1] %vm276, 0
      %290 = vst.msk [vmem:[#allocation2 + $0x38] sm:$0xf] %vm274, 0
      %291 = vst.msk [vmem:[#allocation2 + $0x3c] sm:$0x1] %vm276, 0
      %292 = vst.msk [vmem:[#allocation2 + $0x40] sm:$0xf] %vm274, 0
      %293 = vst.msk [vmem:[#allocation2 + $0x44] sm:$0x1] %vm276, 0
      %294 = vst.msk [vmem:[#allocation2 + $0x48] sm:$0xf] %vm274, 0
      %295 = vst.msk [vmem:[#allocation2 + $0x4c] sm:$0x1] %vm276, 0
      %v296 = vpack.c.bf16 %v266, %v266
      %v297 = vpack.c.bf16 %v267, %v267
      %v298 = vpack.c.bf16 %v268, %v268
      %v299 = vpack.c.bf16 %v269, %v269
      %v300 = vpack.c.bf16 %v270, %v270
      %v301 = vpack.c.bf16 %v271, %v271
      %v302 = vpack.c.bf16 %v272, %v272
      %v303 = vpack.c.bf16 %v273, %v273
      %v312 = vunpack.c.l.b16 %v296
      %v313 = vunpack.c.l.b16 %v297
      %v314 = vunpack.c.l.b16 %v298
      %v315 = vunpack.c.l.b16 %v299
      %v316 = vunpack.c.l.b16 %v300
      %v317 = vunpack.c.l.b16 %v301
      %v318 = vunpack.c.l.b16 %v302
      %v319 = vunpack.c.l.b16 %v303
      %v320 = vpack.c.b16 %v312, %v312
      %v321 = vpack.c.b16 %v313, %v313
      %v322 = vpack.c.b16 %v314, %v314
      %v323 = vpack.c.b16 %v315, %v315
      %v324 = vpack.c.b16 %v316, %v316
      %v325 = vpack.c.b16 %v317, %v317
      %v326 = vpack.c.b16 %v318, %v318
      %v327 = vpack.c.b16 %v319, %v319
      %v329 = vshrl.u32 %v320, 16
      %v331 = vrot.slane %v329, 7
      %v332 = vshll.u32 %v320, 16
      %v334 = vor.u32 %v331, %v332
      %v335 = vrot.slane %v331, 4
      %v337 = vshrl.u32 %v321, 16
      %v339 = vrot.slane %v337, 7
      %v340 = vshll.u32 %v321, 16
      %v342 = vor.u32 %v339, %v340
      %v343 = vrot.slane %v339, 4
      %v345 = vshrl.u32 %v322, 16
      %v347 = vrot.slane %v345, 7
      %v348 = vshll.u32 %v322, 16
      %v350 = vor.u32 %v347, %v348
      %v351 = vrot.slane %v347, 4
      %v353 = vshrl.u32 %v323, 16
      %v355 = vrot.slane %v353, 7
      %v356 = vshll.u32 %v323, 16
      %v358 = vor.u32 %v355, %v356
      %v359 = vrot.slane %v355, 4
      %v361 = vshrl.u32 %v324, 16
      %v363 = vrot.slane %v361, 7
      %v364 = vshll.u32 %v324, 16
      %v366 = vor.u32 %v363, %v364
      %v367 = vrot.slane %v363, 4
      %v369 = vshrl.u32 %v325, 16
      %v371 = vrot.slane %v369, 7
      %v372 = vshll.u32 %v325, 16
      %v374 = vor.u32 %v371, %v372
      %v375 = vrot.slane %v371, 4
      %v377 = vshrl.u32 %v326, 16
      %v379 = vrot.slane %v377, 7
      %v380 = vshll.u32 %v326, 16
      %v382 = vor.u32 %v379, %v380
      %v383 = vrot.slane %v379, 4
      %v385 = vshrl.u32 %v327, 16
      %v387 = vrot.slane %v385, 7
      %v388 = vshll.u32 %v327, 16
      %v390 = vor.u32 %v387, %v388
      %v391 = vrot.slane %v387, 4
      %s408 = scalar_lea.vmem [#allocation2], 8
      %vm409 = vcmask 27648
      %vm410 = vsmask.f32 7938
      %vm411 = vmand %vm409, %vm410
      %v412 = vld [vmem:[%s408] sm:$0xf]
      %v413 = vsel %vm411, %v334, %v412
      %414 = vst [vmem:[%s408] sm:$0xf] %v413
      %vm415 = vcmask 24576
      %vm416 = vsmask.f32 256
      %vm417 = vmand %vm415, %vm416
      %v418 = vld [vmem:[%s408 + $0x4] sm:$0x1]
      %v419 = vsel %vm417, %v335, %v418
      %420 = vst [vmem:[%s408 + $0x4] sm:$0x1] %v419
      %v421 = vld [vmem:[%s408 + $0x8] sm:$0xf]
      %v422 = vsel %vm411, %v342, %v421
      %423 = vst [vmem:[%s408 + $0x8] sm:$0xf] %v422
      %v424 = vld [vmem:[%s408 + $0xc] sm:$0x1]
      %v425 = vsel %vm417, %v343, %v424
      %426 = vst [vmem:[%s408 + $0xc] sm:$0x1] %v425
      %v427 = vld [vmem:[%s408 + $0x10] sm:$0xf]
      %v428 = vsel %vm411, %v350, %v427
      %429 = vst [vmem:[%s408 + $0x10] sm:$0xf] %v428
      %v430 = vld [vmem:[%s408 + $0x14] sm:$0x1]
      %v431 = vsel %vm417, %v351, %v430
      %432 = vst [vmem:[%s408 + $0x14] sm:$0x1] %v431
      %v433 = vld [vmem:[%s408 + $0x18] sm:$0xf]
      %v434 = vsel %vm411, %v358, %v433
      %435 = vst [vmem:[%s408 + $0x18] sm:$0xf] %v434
      %v436 = vld [vmem:[%s408 + $0x1c] sm:$0x1]
      %v437 = vsel %vm417, %v359, %v436
      %438 = vst [vmem:[%s408 + $0x1c] sm:$0x1] %v437
      %v439 = vld [vmem:[%s408 + $0x20] sm:$0xf]
      %v440 = vsel %vm411, %v366, %v439
      %441 = vst [vmem:[%s408 + $0x20] sm:$0xf] %v440
      %v442 = vld [vmem:[%s408 + $0x24] sm:$0x1]
      %v443 = vsel %vm417, %v367, %v442
      %444 = vst [vmem:[%s408 + $0x24] sm:$0x1] %v443
      %v445 = vld [vmem:[%s408 + $0x28] sm:$0xf]
      %v446 = vsel %vm411, %v374, %v445
      %447 = vst [vmem:[%s408 + $0x28] sm:$0xf] %v446
      %v448 = vld [vmem:[%s408 + $0x2c] sm:$0x1]
      %v449 = vsel %vm417, %v375, %v448
      %450 = vst [vmem:[%s408 + $0x2c] sm:$0x1] %v449
      %v451 = vld [vmem:[%s408 + $0x30] sm:$0xf]
      %v452 = vsel %vm411, %v382, %v451
      %453 = vst [vmem:[%s408 + $0x30] sm:$0xf] %v452
      %v454 = vld [vmem:[%s408 + $0x34] sm:$0x1]
      %v455 = vsel %vm417, %v383, %v454
      %456 = vst [vmem:[%s408 + $0x34] sm:$0x1] %v455
      %v457 = vld [vmem:[%s408 + $0x38] sm:$0xf]
      %v458 = vsel %vm411, %v390, %v457
      %459 = vst [vmem:[%s408 + $0x38] sm:$0xf] %v458
      %v460 = vld [vmem:[%s408 + $0x3c] sm:$0x1]
      %v461 = vsel %vm417, %v391, %v460
      %462 = vst [vmem:[%s408 + $0x3c] sm:$0x1] %v461
      %v463 = vld [vmem:[#allocation2] sm:$0xf]
      %v464 = vld [vmem:[#allocation2 + $0x8] sm:$0xf]
      %v465 = vld [vmem:[#allocation2 + $0x10] sm:$0xf]
      %v466 = vld [vmem:[#allocation2 + $0x18] sm:$0xf]
      %v467 = vld [vmem:[#allocation2 + $0x20] sm:$0xf]
      %v468 = vld [vmem:[#allocation2 + $0x28] sm:$0xf]
      %v469 = vld [vmem:[#allocation2 + $0x30] sm:$0xf]
      %v470 = vld [vmem:[#allocation2 + $0x38] sm:$0xf]
      %v471 = vld [vmem:[#allocation2 + $0x4] sm:$0x1]
      %v472 = vld [vmem:[#allocation2 + $0xc] sm:$0x1]
      %v473 = vld [vmem:[#allocation2 + $0x14] sm:$0x1]
      %v474 = vld [vmem:[#allocation2 + $0x1c] sm:$0x1]
      %v475 = vld [vmem:[#allocation2 + $0x24] sm:$0x1]
      %v476 = vld [vmem:[#allocation2 + $0x2c] sm:$0x1]
      %v477 = vld [vmem:[#allocation2 + $0x34] sm:$0x1]
      %v478 = vld [vmem:[#allocation2 + $0x3c] sm:$0x1]
      %v479 = vld [vmem:[#allocation2] sm:$0xe]
      %v480 = vld [vmem:[#allocation2 + $0x8] sm:$0xe]
      %v481 = vld [vmem:[#allocation2 + $0x10] sm:$0xe]
      %v482 = vld [vmem:[#allocation2 + $0x18] sm:$0xe]
      %v483 = vld [vmem:[#allocation2 + $0x20] sm:$0xe]
      %v484 = vld [vmem:[#allocation2 + $0x28] sm:$0xe]
      %v485 = vld [vmem:[#allocation2 + $0x30] sm:$0xe]
      %v486 = vld [vmem:[#allocation2 + $0x38] sm:$0xe]
      %v487 = vld [vmem:[%s408] sm:$0xf]
      %v488 = vld [vmem:[%s408 + $0x8] sm:$0xf]
      %v489 = vld [vmem:[%s408 + $0x10] sm:$0xf]
      %v490 = vld [vmem:[%s408 + $0x18] sm:$0xf]
      %v491 = vld [vmem:[%s408 + $0x20] sm:$0xf]
      %v492 = vld [vmem:[%s408 + $0x28] sm:$0xf]
      %v493 = vld [vmem:[%s408 + $0x30] sm:$0xf]
      %v494 = vld [vmem:[%s408 + $0x38] sm:$0xf]
      %v495 = vld [vmem:[%s408 + $0x4] sm:$0x1]
      %v496 = vld [vmem:[%s408 + $0xc] sm:$0x1]
      %v497 = vld [vmem:[%s408 + $0x14] sm:$0x1]
      %v498 = vld [vmem:[%s408 + $0x1c] sm:$0x1]
      %v499 = vld [vmem:[%s408 + $0x24] sm:$0x1]
      %v500 = vld [vmem:[%s408 + $0x2c] sm:$0x1]
      %v501 = vld [vmem:[%s408 + $0x34] sm:$0x1]
      %v502 = vld [vmem:[%s408 + $0x3c] sm:$0x1]
      %v503 = vld [vmem:[%s408] sm:$0xe]
      %v504 = vld [vmem:[%s408 + $0x8] sm:$0xe]
      %v505 = vld [vmem:[%s408 + $0x10] sm:$0xe]
      %v506 = vld [vmem:[%s408 + $0x18] sm:$0xe]
      %v507 = vld [vmem:[%s408 + $0x20] sm:$0xe]
      %v508 = vld [vmem:[%s408 + $0x28] sm:$0xe]
      %v509 = vld [vmem:[%s408 + $0x30] sm:$0xe]
      %v510 = vld [vmem:[%s408 + $0x38] sm:$0xe]
      %s511 = scalar_lea.vmem [#allocation2], 16
      %v512 = vld [vmem:[%s511] sm:$0xf]
      %v513 = vld [vmem:[%s511 + $0x8] sm:$0xf]
      %v514 = vld [vmem:[%s511 + $0x10] sm:$0xf]
      %v515 = vld [vmem:[%s511 + $0x18] sm:$0xf]
      %v516 = vld [vmem:[%s511 + $0x20] sm:$0xf]
      %v517 = vld [vmem:[%s511 + $0x28] sm:$0xf]
      %v518 = vld [vmem:[%s511 + $0x30] sm:$0xf]
      %v519 = vld [vmem:[%s511 + $0x38] sm:$0xf]
      %v520 = vld [vmem:[%s511 + $0x4] sm:$0x1]
      %v521 = vld [vmem:[%s511 + $0xc] sm:$0x1]
      %v522 = vld [vmem:[%s511 + $0x14] sm:$0x1]
      %v523 = vld [vmem:[%s511 + $0x1c] sm:$0x1]
      %v524 = vld [vmem:[%s511 + $0x24] sm:$0x1]
      %v525 = vld [vmem:[%s511 + $0x2c] sm:$0x1]
      %v526 = vld [vmem:[%s511 + $0x34] sm:$0x1]
      %v527 = vld [vmem:[%s511 + $0x3c] sm:$0x1]
      %v528 = vld [vmem:[%s511] sm:$0xe]
      %v529 = vld [vmem:[%s511 + $0x8] sm:$0xe]
      %v530 = vld [vmem:[%s511 + $0x10] sm:$0xe]
      %v531 = vld [vmem:[%s511 + $0x18] sm:$0xe]
      %v532 = vld [vmem:[%s511 + $0x20] sm:$0xe]
      %v533 = vld [vmem:[%s511 + $0x28] sm:$0xe]
      %v534 = vld [vmem:[%s511 + $0x30] sm:$0xe]
      %v535 = vld [vmem:[%s511 + $0x38] sm:$0xe]
      %v552 = vunpack.c.l.b16 %v463
      %v553 = vunpack.c.l.b16 %v471
      %v554 = vunpack.c.l.b16 %v464
      %v555 = vunpack.c.l.b16 %v472
      %v556 = vunpack.c.l.b16 %v465
      %v557 = vunpack.c.l.b16 %v473
      %v558 = vunpack.c.l.b16 %v466
      %v559 = vunpack.c.l.b16 %v474
      %v560 = vunpack.c.l.b16 %v467
      %v561 = vunpack.c.l.b16 %v475
      %v562 = vunpack.c.l.b16 %v468
      %v563 = vunpack.c.l.b16 %v476
      %v564 = vunpack.c.l.b16 %v469
      %v565 = vunpack.c.l.b16 %v477
      %v566 = vunpack.c.l.b16 %v470
      %v567 = vunpack.c.l.b16 %v478
      %v568 = vpack.c.b16 %v553, %v552
      %v569 = vpack.c.b16 %v555, %v554
      %v570 = vpack.c.b16 %v557, %v556
      %v571 = vpack.c.b16 %v559, %v558
      %v572 = vpack.c.b16 %v561, %v560
      %v573 = vpack.c.b16 %v563, %v562
      %v574 = vpack.c.b16 %v565, %v564
      %v575 = vpack.c.b16 %v567, %v566
      %v577 = vshrl.u32 %v568, 16
      %v579 = vshll.u32 %v568, 16
      %v581 = vrot.slane %v579, 1
      %v582 = vor.u32 %v577, %v581
      %v584 = vshrl.u32 %v569, 16
      %v586 = vshll.u32 %v569, 16
      %v588 = vrot.slane %v586, 1
      %v589 = vor.u32 %v584, %v588
      %v591 = vshrl.u32 %v570, 16
      %v593 = vshll.u32 %v570, 16
      %v595 = vrot.slane %v593, 1
      %v596 = vor.u32 %v591, %v595
      %v598 = vshrl.u32 %v571, 16
      %v600 = vshll.u32 %v571, 16
      %v602 = vrot.slane %v600, 1
      %v603 = vor.u32 %v598, %v602
      %v605 = vshrl.u32 %v572, 16
      %v607 = vshll.u32 %v572, 16
      %v609 = vrot.slane %v607, 1
      %v610 = vor.u32 %v605, %v609
      %v612 = vshrl.u32 %v573, 16
      %v614 = vshll.u32 %v573, 16
      %v616 = vrot.slane %v614, 1
      %v617 = vor.u32 %v612, %v616
      %v619 = vshrl.u32 %v574, 16
      %v621 = vshll.u32 %v574, 16
      %v623 = vrot.slane %v621, 1
      %v624 = vor.u32 %v619, %v623
      %v626 = vshrl.u32 %v575, 16
      %v628 = vshll.u32 %v575, 16
      %v630 = vrot.slane %v628, 1
      %v631 = vor.u32 %v626, %v630
      %632 = vrot.lane.b32.xlu0 %v582, 4
      %v633 = vpop.permute.xlu0 %632
      %634 = vrot.lane.b32.xlu0 %v589, 4
      %v635 = vpop.permute.xlu0 %634
      %636 = vrot.lane.b32.xlu0 %v596, 4
      %v637 = vpop.permute.xlu0 %636
      %638 = vrot.lane.b32.xlu0 %v603, 4
      %v639 = vpop.permute.xlu0 %638
      %640 = vrot.lane.b32.xlu0 %v610, 4
      %v641 = vpop.permute.xlu0 %640
      %642 = vrot.lane.b32.xlu0 %v617, 4
      %v643 = vpop.permute.xlu0 %642
      %644 = vrot.lane.b32.xlu0 %v624, 4
      %v645 = vpop.permute.xlu0 %644
      %646 = vrot.lane.b32.xlu0 %v631, 4
      %v647 = vpop.permute.xlu0 %646
      %v656 = vunpack.c.l.b16 %v479
      %v657 = vunpack.c.l.b16 %v480
      %v658 = vunpack.c.l.b16 %v481
      %v659 = vunpack.c.l.b16 %v482
      %v660 = vunpack.c.l.b16 %v483
      %v661 = vunpack.c.l.b16 %v484
      %v662 = vunpack.c.l.b16 %v485
      %v663 = vunpack.c.l.b16 %v486
      %v664 = vpack.c.b16 %v553, %v656
      %v665 = vpack.c.b16 %v555, %v657
      %v666 = vpack.c.b16 %v557, %v658
      %v667 = vpack.c.b16 %v559, %v659
      %v668 = vpack.c.b16 %v561, %v660
      %v669 = vpack.c.b16 %v563, %v661
      %v670 = vpack.c.b16 %v565, %v662
      %v671 = vpack.c.b16 %v567, %v663
      %v672 = vrot.slane %v664, 1
      %v673 = vrot.slane %v665, 1
      %v674 = vrot.slane %v666, 1
      %v675 = vrot.slane %v667, 1
      %v676 = vrot.slane %v668, 1
      %v677 = vrot.slane %v669, 1
      %v678 = vrot.slane %v670, 1
      %v679 = vrot.slane %v671, 1
      %680 = vrot.lane.b32.xlu0 %v672, 8
      %v681 = vpop.permute.xlu0 %680
      %682 = vrot.lane.b32.xlu0 %v673, 8
      %v683 = vpop.permute.xlu0 %682
      %684 = vrot.lane.b32.xlu0 %v674, 8
      %v685 = vpop.permute.xlu0 %684
      %686 = vrot.lane.b32.xlu0 %v675, 8
      %v687 = vpop.permute.xlu0 %686
      %688 = vrot.lane.b32.xlu0 %v676, 8
      %v689 = vpop.permute.xlu0 %688
      %690 = vrot.lane.b32.xlu0 %v677, 8
      %v691 = vpop.permute.xlu0 %690
      %692 = vrot.lane.b32.xlu0 %v678, 8
      %v693 = vpop.permute.xlu0 %692
      %694 = vrot.lane.b32.xlu0 %v679, 8
      %v695 = vpop.permute.xlu0 %694
      %v704 = vunpack.c.l.b16 %v487
      %v705 = vunpack.c.l.b16 %v488
      %v706 = vunpack.c.l.b16 %v489
      %v707 = vunpack.c.l.b16 %v490
      %v708 = vunpack.c.l.b16 %v491
      %v709 = vunpack.c.l.b16 %v492
      %v710 = vunpack.c.l.b16 %v493
      %v711 = vunpack.c.l.b16 %v494
      %v712 = vpack.c.b16 %v704, %v704
      %v713 = vpack.c.b16 %v705, %v705
      %v714 = vpack.c.b16 %v706, %v706
      %v715 = vpack.c.b16 %v707, %v707
      %v716 = vpack.c.b16 %v708, %v708
      %v717 = vpack.c.b16 %v709, %v709
      %v718 = vpack.c.b16 %v710, %v710
      %v719 = vpack.c.b16 %v711, %v711
      %720 = vrot.lane.b32.xlu0 %v712, 12
      %v721 = vpop.permute.xlu0 %720
      %722 = vrot.lane.b32.xlu0 %v713, 12
      %v723 = vpop.permute.xlu0 %722
      %724 = vrot.lane.b32.xlu0 %v714, 12
      %v725 = vpop.permute.xlu0 %724
      %726 = vrot.lane.b32.xlu0 %v715, 12
      %v727 = vpop.permute.xlu0 %726
      %728 = vrot.lane.b32.xlu0 %v716, 12
      %v729 = vpop.permute.xlu0 %728
      %730 = vrot.lane.b32.xlu0 %v717, 12
      %v731 = vpop.permute.xlu0 %730
      %732 = vrot.lane.b32.xlu0 %v718, 12
      %v733 = vpop.permute.xlu0 %732
      %734 = vrot.lane.b32.xlu0 %v719, 12
      %v735 = vpop.permute.xlu0 %734
      %v744 = vunpack.c.l.b16 %v495
      %v745 = vunpack.c.l.b16 %v496
      %v746 = vunpack.c.l.b16 %v497
      %v747 = vunpack.c.l.b16 %v498
      %v748 = vunpack.c.l.b16 %v499
      %v749 = vunpack.c.l.b16 %v500
      %v750 = vunpack.c.l.b16 %v501
      %v751 = vunpack.c.l.b16 %v502
      %v752 = vpack.c.b16 %v744, %v704
      %v753 = vpack.c.b16 %v745, %v705
      %v754 = vpack.c.b16 %v746, %v706
      %v755 = vpack.c.b16 %v747, %v707
      %v756 = vpack.c.b16 %v748, %v708
      %v757 = vpack.c.b16 %v749, %v709
      %v758 = vpack.c.b16 %v750, %v710
      %v759 = vpack.c.b16 %v751, %v711
      %v761 = vshrl.u32 %v752, 16
      %v763 = vshll.u32 %v752, 16
      %v765 = vrot.slane %v763, 1
      %v766 = vor.u32 %v761, %v765
      %v768 = vshrl.u32 %v753, 16
      %v770 = vshll.u32 %v753, 16
      %v772 = vrot.slane %v770, 1
      %v773 = vor.u32 %v768, %v772
      %v775 = vshrl.u32 %v754, 16
      %v777 = vshll.u32 %v754, 16
      %v779 = vrot.slane %v777, 1
      %v780 = vor.u32 %v775, %v779
      %v782 = vshrl.u32 %v755, 16
      %v784 = vshll.u32 %v755, 16
      %v786 = vrot.slane %v784, 1
      %v787 = vor.u32 %v782, %v786
      %v789 = vshrl.u32 %v756, 16
      %v791 = vshll.u32 %v756, 16
      %v793 = vrot.slane %v791, 1
      %v794 = vor.u32 %v789, %v793
      %v796 = vshrl.u32 %v757, 16
      %v798 = vshll.u32 %v757, 16
      %v800 = vrot.slane %v798, 1
      %v801 = vor.u32 %v796, %v800
      %v803 = vshrl.u32 %v758, 16
      %v805 = vshll.u32 %v758, 16
      %v807 = vrot.slane %v805, 1
      %v808 = vor.u32 %v803, %v807
      %v810 = vshrl.u32 %v759, 16
      %v812 = vshll.u32 %v759, 16
      %v814 = vrot.slane %v812, 1
      %v815 = vor.u32 %v810, %v814
      %816 = vrot.lane.b32.xlu0 %v766, 16
      %v817 = vpop.permute.xlu0 %816
      %818 = vrot.lane.b32.xlu0 %v773, 16
      %v819 = vpop.permute.xlu0 %818
      %820 = vrot.lane.b32.xlu0 %v780, 16
      %v821 = vpop.permute.xlu0 %820
      %822 = vrot.lane.b32.xlu0 %v787, 16
      %v823 = vpop.permute.xlu0 %822
      %824 = vrot.lane.b32.xlu0 %v794, 16
      %v825 = vpop.permute.xlu0 %824
      %826 = vrot.lane.b32.xlu0 %v801, 16
      %v827 = vpop.permute.xlu0 %826
      %828 = vrot.lane.b32.xlu0 %v808, 16
      %v829 = vpop.permute.xlu0 %828
      %830 = vrot.lane.b32.xlu0 %v815, 16
      %v831 = vpop.permute.xlu0 %830
      %v840 = vunpack.c.l.b16 %v503
      %v841 = vunpack.c.l.b16 %v504
      %v842 = vunpack.c.l.b16 %v505
      %v843 = vunpack.c.l.b16 %v506
      %v844 = vunpack.c.l.b16 %v507
      %v845 = vunpack.c.l.b16 %v508
      %v846 = vunpack.c.l.b16 %v509
      %v847 = vunpack.c.l.b16 %v510
      %v848 = vpack.c.b16 %v744, %v840
      %v849 = vpack.c.b16 %v745, %v841
      %v850 = vpack.c.b16 %v746, %v842
      %v851 = vpack.c.b16 %v747, %v843
      %v852 = vpack.c.b16 %v748, %v844
      %v853 = vpack.c.b16 %v749, %v845
      %v854 = vpack.c.b16 %v750, %v846
      %v855 = vpack.c.b16 %v751, %v847
      %v856 = vrot.slane %v848, 1
      %v857 = vrot.slane %v849, 1
      %v858 = vrot.slane %v850, 1
      %v859 = vrot.slane %v851, 1
      %v860 = vrot.slane %v852, 1
      %v861 = vrot.slane %v853, 1
      %v862 = vrot.slane %v854, 1
      %v863 = vrot.slane %v855, 1
      %864 = vrot.lane.b32.xlu0 %v856, 20
      %v865 = vpop.permute.xlu0 %864
      %866 = vrot.lane.b32.xlu0 %v857, 20
      %v867 = vpop.permute.xlu0 %866
      %868 = vrot.lane.b32.xlu0 %v858, 20
      %v869 = vpop.permute.xlu0 %868
      %870 = vrot.lane.b32.xlu0 %v859, 20
      %v871 = vpop.permute.xlu0 %870
      %872 = vrot.lane.b32.xlu0 %v860, 20
      %v873 = vpop.permute.xlu0 %872
      %874 = vrot.lane.b32.xlu0 %v861, 20
      %v875 = vpop.permute.xlu0 %874
      %876 = vrot.lane.b32.xlu0 %v862, 20
      %v877 = vpop.permute.xlu0 %876
      %878 = vrot.lane.b32.xlu0 %v863, 20
      %v879 = vpop.permute.xlu0 %878
      %v888 = vunpack.c.l.b16 %v512
      %v889 = vunpack.c.l.b16 %v513
      %v890 = vunpack.c.l.b16 %v514
      %v891 = vunpack.c.l.b16 %v515
      %v892 = vunpack.c.l.b16 %v516
      %v893 = vunpack.c.l.b16 %v517
      %v894 = vunpack.c.l.b16 %v518
      %v895 = vunpack.c.l.b16 %v519
      %v896 = vpack.c.b16 %v888, %v888
      %v897 = vpack.c.b16 %v889, %v889
      %v898 = vpack.c.b16 %v890, %v890
      %v899 = vpack.c.b16 %v891, %v891
      %v900 = vpack.c.b16 %v892, %v892
      %v901 = vpack.c.b16 %v893, %v893
      %v902 = vpack.c.b16 %v894, %v894
      %v903 = vpack.c.b16 %v895, %v895
      %904 = vrot.lane.b32.xlu0 %v896, 24
      %v905 = vpop.permute.xlu0 %904
      %906 = vrot.lane.b32.xlu0 %v897, 24
      %v907 = vpop.permute.xlu0 %906
      %908 = vrot.lane.b32.xlu0 %v898, 24
      %v909 = vpop.permute.xlu0 %908
      %910 = vrot.lane.b32.xlu0 %v899, 24
      %v911 = vpop.permute.xlu0 %910
      %912 = vrot.lane.b32.xlu0 %v900, 24
      %v913 = vpop.permute.xlu0 %912
      %914 = vrot.lane.b32.xlu0 %v901, 24
      %v915 = vpop.permute.xlu0 %914
      %916 = vrot.lane.b32.xlu0 %v902, 24
      %v917 = vpop.permute.xlu0 %916
      %918 = vrot.lane.b32.xlu0 %v903, 24
      %v919 = vpop.permute.xlu0 %918
      %v928 = vunpack.c.l.b16 %v520
      %v929 = vunpack.c.l.b16 %v521
      %v930 = vunpack.c.l.b16 %v522
      %v931 = vunpack.c.l.b16 %v523
      %v932 = vunpack.c.l.b16 %v524
      %v933 = vunpack.c.l.b16 %v525
      %v934 = vunpack.c.l.b16 %v526
      %v935 = vunpack.c.l.b16 %v527
      %v936 = vpack.c.b16 %v928, %v888
      %v937 = vpack.c.b16 %v929, %v889
      %v938 = vpack.c.b16 %v930, %v890
      %v939 = vpack.c.b16 %v931, %v891
      %v940 = vpack.c.b16 %v932, %v892
      %v941 = vpack.c.b16 %v933, %v893
      %v942 = vpack.c.b16 %v934, %v894
      %v943 = vpack.c.b16 %v935, %v895
      %v945 = vshrl.u32 %v936, 16
      %v947 = vshll.u32 %v936, 16
      %v949 = vrot.slane %v947, 1
      %v950 = vor.u32 %v945, %v949
      %v952 = vshrl.u32 %v937, 16
      %v954 = vshll.u32 %v937, 16
      %v956 = vrot.slane %v954, 1
      %v957 = vor.u32 %v952, %v956
      %v959 = vshrl.u32 %v938, 16
      %v961 = vshll.u32 %v938, 16
      %v963 = vrot.slane %v961, 1
      %v964 = vor.u32 %v959, %v963
      %v966 = vshrl.u32 %v939, 16
      %v968 = vshll.u32 %v939, 16
      %v970 = vrot.slane %v968, 1
      %v971 = vor.u32 %v966, %v970
      %v973 = vshrl.u32 %v940, 16
      %v975 = vshll.u32 %v940, 16
      %v977 = vrot.slane %v975, 1
      %v978 = vor.u32 %v973, %v977
      %v980 = vshrl.u32 %v941, 16
      %v982 = vshll.u32 %v941, 16
      %v984 = vrot.slane %v982, 1
      %v985 = vor.u32 %v980, %v984
      %v987 = vshrl.u32 %v942, 16
      %v989 = vshll.u32 %v942, 16
      %v991 = vrot.slane %v989, 1
      %v992 = vor.u32 %v987, %v991
      %v994 = vshrl.u32 %v943, 16
      %v996 = vshll.u32 %v943, 16
      %v998 = vrot.slane %v996, 1
      %v999 = vor.u32 %v994, %v998
      %1000 = vrot.lane.b32.xlu0 %v950, 28
      %v1001 = vpop.permute.xlu0 %1000
      %1002 = vrot.lane.b32.xlu0 %v957, 28
      %v1003 = vpop.permute.xlu0 %1002
      %1004 = vrot.lane.b32.xlu0 %v964, 28
      %v1005 = vpop.permute.xlu0 %1004
      %1006 = vrot.lane.b32.xlu0 %v971, 28
      %v1007 = vpop.permute.xlu0 %1006
      %1008 = vrot.lane.b32.xlu0 %v978, 28
      %v1009 = vpop.permute.xlu0 %1008
      %1010 = vrot.lane.b32.xlu0 %v985, 28
      %v1011 = vpop.permute.xlu0 %1010
      %1012 = vrot.lane.b32.xlu0 %v992, 28
      %v1013 = vpop.permute.xlu0 %1012
      %1014 = vrot.lane.b32.xlu0 %v999, 28
      %v1015 = vpop.permute.xlu0 %1014
      %v1024 = vunpack.c.l.b16 %v528
      %v1025 = vunpack.c.l.b16 %v529
      %v1026 = vunpack.c.l.b16 %v530
      %v1027 = vunpack.c.l.b16 %v531
      %v1028 = vunpack.c.l.b16 %v532
      %v1029 = vunpack.c.l.b16 %v533
      %v1030 = vunpack.c.l.b16 %v534
      %v1031 = vunpack.c.l.b16 %v535
      %v1032 = vpack.c.b16 %v928, %v1024
      %v1033 = vpack.c.b16 %v929, %v1025
      %v1034 = vpack.c.b16 %v930, %v1026
      %v1035 = vpack.c.b16 %v931, %v1027
      %v1036 = vpack.c.b16 %v932, %v1028
      %v1037 = vpack.c.b16 %v933, %v1029
      %v1038 = vpack.c.b16 %v934, %v1030
      %v1039 = vpack.c.b16 %v935, %v1031
      %v1040 = vrot.slane %v1032, 1
      %v1041 = vrot.slane %v1033, 1
      %v1042 = vrot.slane %v1034, 1
      %v1043 = vrot.slane %v1035, 1
      %v1044 = vrot.slane %v1036, 1
      %v1045 = vrot.slane %v1037, 1
      %v1046 = vrot.slane %v1038, 1
      %v1047 = vrot.slane %v1039, 1
      %1048 = vrot.lane.b32.xlu0 %v1040, 32
      %v1049 = vpop.permute.xlu0 %1048
      %1050 = vrot.lane.b32.xlu0 %v1041, 32
      %v1051 = vpop.permute.xlu0 %1050
      %1052 = vrot.lane.b32.xlu0 %v1042, 32
      %v1053 = vpop.permute.xlu0 %1052
      %1054 = vrot.lane.b32.xlu0 %v1043, 32
      %v1055 = vpop.permute.xlu0 %1054
      %1056 = vrot.lane.b32.xlu0 %v1044, 32
      %v1057 = vpop.permute.xlu0 %1056
      %1058 = vrot.lane.b32.xlu0 %v1045, 32
      %v1059 = vpop.permute.xlu0 %1058
      %1060 = vrot.lane.b32.xlu0 %v1046, 32
      %v1061 = vpop.permute.xlu0 %1060
      %1062 = vrot.lane.b32.xlu0 %v1047, 32
      %v1063 = vpop.permute.xlu0 %1062
      %vm1064 = vcmask 31744
      %v1067 = vsel %vm1064, %v463, %v633
      %v1070 = vsel %vm1064, %v464, %v635
      %v1073 = vsel %vm1064, %v465, %v637
      %v1076 = vsel %vm1064, %v466, %v639
      %v1079 = vsel %vm1064, %v467, %v641
      %v1082 = vsel %vm1064, %v468, %v643
      %v1085 = vsel %vm1064, %v469, %v645
      %v1088 = vsel %vm1064, %v470, %v647
      %vm1089 = vcmask 64512
      %v1091 = vsel %vm1089, %v1067, %v681
      %v1093 = vsel %vm1089, %v1070, %v683
      %v1095 = vsel %vm1089, %v1073, %v685
      %v1097 = vsel %vm1089, %v1076, %v687
      %v1099 = vsel %vm1089, %v1079, %v689
      %v1101 = vsel %vm1089, %v1082, %v691
      %v1103 = vsel %vm1089, %v1085, %v693
      %v1105 = vsel %vm1089, %v1088, %v695
      %vm1106 = vcmask 97280
      %v1108 = vsel %vm1106, %v1091, %v721
      %v1110 = vsel %vm1106, %v1093, %v723
      %v1112 = vsel %vm1106, %v1095, %v725
      %v1114 = vsel %vm1106, %v1097, %v727
      %v1116 = vsel %vm1106, %v1099, %v729
      %v1118 = vsel %vm1106, %v1101, %v731
      %v1120 = vsel %vm1106, %v1103, %v733
      %v1122 = vsel %vm1106, %v1105, %v735
      %vm1123 = vcmask 130048
      %v1125 = vsel %vm1123, %v1108, %v817
      %v1127 = vsel %vm1123, %v1110, %v819
      %v1129 = vsel %vm1123, %v1112, %v821
      %v1131 = vsel %vm1123, %v1114, %v823
      %v1133 = vsel %vm1123, %v1116, %v825
      %v1135 = vsel %vm1123, %v1118, %v827
      %v1137 = vsel %vm1123, %v1120, %v829
      %v1139 = vsel %vm1123, %v1122, %v831
      %vm1140 = vcmask 162816
      %v1142 = vsel %vm1140, %v1125, %v865
      %v1144 = vsel %vm1140, %v1127, %v867
      %v1146 = vsel %vm1140, %v1129, %v869
      %v1148 = vsel %vm1140, %v1131, %v871
      %v1150 = vsel %vm1140, %v1133, %v873
      %v1152 = vsel %vm1140, %v1135, %v875
      %v1154 = vsel %vm1140, %v1137, %v877
      %v1156 = vsel %vm1140, %v1139, %v879
      %vm1157 = vcmask 195584
      %v1159 = vsel %vm1157, %v1142, %v905
      %v1161 = vsel %vm1157, %v1144, %v907
      %v1163 = vsel %vm1157, %v1146, %v909
      %v1165 = vsel %vm1157, %v1148, %v911
      %v1167 = vsel %vm1157, %v1150, %v913
      %v1169 = vsel %vm1157, %v1152, %v915
      %v1171 = vsel %vm1157, %v1154, %v917
      %v1173 = vsel %vm1157, %v1156, %v919
      %vm1174 = vcmask 228352
      %v1176 = vsel %vm1174, %v1159, %v1001
      %v1178 = vsel %vm1174, %v1161, %v1003
      %v1180 = vsel %vm1174, %v1163, %v1005
      %v1182 = vsel %vm1174, %v1165, %v1007
      %v1184 = vsel %vm1174, %v1167, %v1009
      %v1186 = vsel %vm1174, %v1169, %v1011
      %v1188 = vsel %vm1174, %v1171, %v1013
      %v1190 = vsel %vm1174, %v1173, %v1015
      %vm1191 = vcmask 261120
      %v1193 = vsel %vm1191, %v1176, %v1049
      %v1195 = vsel %vm1191, %v1178, %v1051
      %v1197 = vsel %vm1191, %v1180, %v1053
      %v1199 = vsel %vm1191, %v1182, %v1055
      %v1201 = vsel %vm1191, %v1184, %v1057
      %v1203 = vsel %vm1191, %v1186, %v1059
      %v1205 = vsel %vm1191, %v1188, %v1061
      %v1207 = vsel %vm1191, %v1190, %v1063
      %v1208 = vld [vmem:[%s1] sm:$0xf]
      %v1209 = vld [vmem:[%s1 + $0x4] sm:$0xf]
      %v1210 = vld [vmem:[%s1 + $0x8] sm:$0xf]
      %v1211 = vld [vmem:[%s1 + $0xc] sm:$0xf]
      %v1212 = vld [vmem:[%s1 + $0x10] sm:$0x3]
      %v1221 = vunpack.c.l.b16 %v1193
      %v1222 = vunpack.c.l.b16 %v1195
      %v1223 = vunpack.c.l.b16 %v1197
      %v1224 = vunpack.c.l.b16 %v1199
      %v1225 = vunpack.c.l.b16 %v1201
      %v1226 = vunpack.c.l.b16 %v1203
      %v1227 = vunpack.c.l.b16 %v1205
      %v1228 = vunpack.c.l.b16 %v1207
      %v1229 = vpack.c.b16 %v1222, %v1221
      %v1230 = vpack.c.b16 %v1224, %v1223
      %v1231 = vpack.c.b16 %v1226, %v1225
      %v1232 = vpack.c.b16 %v1228, %v1227
      %v1238 = vunpack.c.l.b16 %v1208
      %v1239 = vunpack.c.l.b16 %v1209
      %v1240 = vunpack.c.l.b16 %v1210
      %v1241 = vunpack.c.l.b16 %v1211
      %v1242 = vunpack.c.l.b16 %v1212
      %v1243 = vpack.c.b16 %v1239, %v1238
      %v1244 = vpack.c.b16 %v1241, %v1240
      %v1245 = vpack.c.b16 %v1242, %v1242
      %vm1248 = vcmask 293888
      %v1250 = vsel %vm1248, %v1229, 0
      %v1253 = vsel %vm1248, %v1230, 0
      %v1256 = vsel %vm1248, %v1231, 0
      %v1259 = vsel %vm1248, %v1232, 0
      %vm1261 = vcmask 1041408
      %v1263 = vsel %vm1261, %v1245, 0
      %1265 = vmatprep.subr.bf16.mxu0 0
      %1266 = vmatpush1.bf16.msra.mxu0 0
      %1267 = vmatprep.subr.bf16.mxu0 0
      %1268 = vmatpush1.bf16.msra.mxu0 0
      %1269 = vmatprep.subr.bf16.mxu0 0
      %1270 = vmatpush1.bf16.msra.mxu0 0
      %1271 = vmatprep.subr.bf16.mxu0 0
      %1272 = vmatpush1.bf16.msra.mxu0 0
      %1273 = vmatprep.subr.bf16.mxu0 0
      %1274 = vmatpush1.bf16.msra.mxu0 0
      %1275 = vmatprep.subr.bf16.mxu0 0
      %1276 = vmatpush1.bf16.msra.mxu0 %v1263
      %1277 = vmatprep.subr.bf16.mxu0 0
      %1278 = vmatpush1.bf16.msra.mxu0 %v1244
      %1279 = vmatprep.subr.bf16.mxu0 0
      %1280 = vmatpush1.bf16.msra.mxu0 %v1243
      %1281 = vmatprep.subr.bf16.mxu0 0
      %1282 = vmatpush2.bf16.msra.mxu0 0
      %1283 = vmatprep.subr.bf16.mxu0 0
      %1284 = vmatpush2.bf16.msra.mxu0 0
      %1285 = vmatprep.subr.bf16.mxu0 0
      %1286 = vmatpush2.bf16.msra.mxu0 0
      %1287 = vmatprep.subr.bf16.mxu0 0
      %1288 = vmatpush2.bf16.msra.mxu0 0
      %1289 = vmatprep.subr.bf16.mxu0 0
      %1290 = vmatpush2.bf16.msra.mxu0 0
      %1291 = vmatprep.subr.bf16.mxu0 0
      %1292 = vmatpush2.bf16.msra.mxu0 0
      %1293 = vmatprep.subr.bf16.mxu0 0
      %1294 = vmatpush2.bf16.msra.mxu0 0
      %1295 = vmatprep.subr.bf16.mxu0 0
      %1296 = vmatpush2.bf16.msra.mxu0 0
      %1297 = vmatprep.mubr.bf16.mxu0 0
      %1298 = vmatmul.mubr.bf16.gmra.mxu0 %v1250
      %v1299 = vpop.f32.mrf.mxu0
      %v1300 = vadd.f32 0.0, %v1299
      %v1301 = vpop.f32.mrf.mxu0
      %v1302 = vpop.f32.mrf.mxu0
      %v1303 = vadd.f32 0.0, %v1302
      %v1304 = vpop.f32.mrf.mxu0
      %1305 = vmatprep.mubr.bf16.mxu0 0
      %1306 = vmatmul.mubr.bf16.gmra.mxu0 %v1253
      %v1307 = vpop.f32.mrf.mxu0
      %v1308 = vadd.f32 0.0, %v1307
      %v1309 = vpop.f32.mrf.mxu0
      %v1310 = vpop.f32.mrf.mxu0
      %v1311 = vadd.f32 0.0, %v1310
      %v1312 = vpop.f32.mrf.mxu0
      %1313 = vmatprep.mubr.bf16.mxu0 0
      %1314 = vmatmul.mubr.bf16.gmra.mxu0 %v1256
      %v1315 = vpop.f32.mrf.mxu0
      %v1316 = vadd.f32 0.0, %v1315
      %v1317 = vpop.f32.mrf.mxu0
      %v1318 = vpop.f32.mrf.mxu0
      %v1319 = vadd.f32 0.0, %v1318
      %v1320 = vpop.f32.mrf.mxu0
      %1321 = vmatprep.mubr.bf16.mxu0 0
      %1322 = vmatmul.mubr.bf16.gmra.mxu0 %v1259
      %v1323 = vpop.f32.mrf.mxu0
      %v1324 = vadd.f32 0.0, %v1323
      %v1325 = vpop.f32.mrf.mxu0
      %v1326 = vpop.f32.mrf.mxu0
      %v1327 = vadd.f32 0.0, %v1326
      %v1328 = vpop.f32.mrf.mxu0
      %1329 = vdwg.mxu0
      %1330 = vst.msk [vmem:[%s168] sm:$0xff] %vm1089, %v1300
      %1331 = vst.msk [vmem:[%s168 + $0x8] sm:$0xff] %vm1089, %v1303
      %1332 = vst.msk [vmem:[%s168 + $0x10] sm:$0xff] %vm1089, %v1308
      %1333 = vst.msk [vmem:[%s168 + $0x18] sm:$0xff] %vm1089, %v1311
      %1334 = vst.msk [vmem:[%s168 + $0x20] sm:$0xff] %vm1089, %v1316
      %1335 = vst.msk [vmem:[%s168 + $0x28] sm:$0xff] %vm1089, %v1319
      %1336 = vst.msk [vmem:[%s168 + $0x30] sm:$0xff] %vm1089, %v1324
      %1337 = vst.msk [vmem:[%s168 + $0x38] sm:$0xff] %vm1089, %v1327
      %v1338 = vsel %vm1089, %v1300, 0.0
      %v1339 = vsel %vm1089, %v1303, 0.0
      %v1340 = vadd.f32 %v1338, %v1339
      %v1341 = vsel %vm1089, %v1308, 0.0
      %v1342 = vadd.f32 %v1340, %v1341
      %v1343 = vsel %vm1089, %v1311, 0.0
      %v1344 = vadd.f32 %v1342, %v1343
      %v1345 = vsel %vm1089, %v1316, 0.0
      %v1346 = vadd.f32 %v1344, %v1345
      %v1347 = vsel %vm1089, %v1319, 0.0
      %v1348 = vadd.f32 %v1346, %v1347
      %v1349 = vsel %vm1089, %v1324, 0.0
      %v1350 = vadd.f32 %v1348, %v1349
      %v1351 = vsel %vm1089, %v1327, 0.0
      %v1352 = vadd.f32 %v1350, %v1351
      %v1353 = vrot.slane %v1352, 4
      %v1354 = vadd.f32 %v1352, %v1353
      %v1355 = vrot.slane %v1354, 2
      %v1356 = vadd.f32 %v1354, %v1355
      %v1357 = vrot.slane %v1356, 1
      %v1358 = vadd.f32 %v1356, %v1357
      %v1359 = vmul.f32 %v1300, %v1300
      %v1360 = vmul.f32 %v1303, %v1303
      %v1361 = vmul.f32 %v1308, %v1308
      %v1362 = vmul.f32 %v1311, %v1311
      %v1363 = vmul.f32 %v1316, %v1316
      %v1364 = vmul.f32 %v1319, %v1319
      %v1365 = vmul.f32 %v1324, %v1324
      %v1366 = vmul.f32 %v1327, %v1327
      %v1367 = vsel %vm1089, %v1359, 0.0
      %v1368 = vsel %vm1089, %v1360, 0.0
      %v1369 = vadd.f32 %v1367, %v1368
      %v1370 = vsel %vm1089, %v1361, 0.0
      %v1371 = vadd.f32 %v1369, %v1370
      %v1372 = vsel %vm1089, %v1362, 0.0
      %v1373 = vadd.f32 %v1371, %v1372
      %v1374 = vsel %vm1089, %v1363, 0.0
      %v1375 = vadd.f32 %v1373, %v1374
      %v1376 = vsel %vm1089, %v1364, 0.0
      %v1377 = vadd.f32 %v1375, %v1376
      %v1378 = vsel %vm1089, %v1365, 0.0
      %v1379 = vadd.f32 %v1377, %v1378
      %v1380 = vsel %vm1089, %v1366, 0.0
      %v1381 = vadd.f32 %v1379, %v1380
      %v1382 = vrot.slane %v1381, 4
      %v1383 = vadd.f32 %v1381, %v1382
      %v1384 = vrot.slane %v1383, 2
      %v1385 = vadd.f32 %v1383, %v1384
      %v1386 = vrot.slane %v1385, 1
      %v1387 = vadd.f32 %v1385, %v1386
      %vm1388 = vcmask 1040384
      %v1389 = vsel %vm1388, %v1358, %v1387
      %p1390 = scmp.eq.s32.totalorder %s15, 0
      // Predicated region
      $region29: #{unet_downsample.3} parent=27 // pred_check
        %p1391 = pneg %p1390
      $region30: #{unet_downsample.3} parent=27 // pred_check_branch
        %1393 = sbr.rel (%p1391) target = $region32
      $region31: #{unet_downsample.3} parent=27 // pred_region
        %vm1394 = vcmask 58368
        %1395 = vst.msk [vmem:[%s3] sm:$0x3] %vm1394, %v1389
      $region32: #{unet_downsample.3} parent=27 // pred_fallthru
        _
      %p1396 = scmp.ne.s32.totalorder %s15, 0
      // Predicated region
      $region33: #{unet_downsample.3} parent=27 // pred_check
        %p1397 = pneg %p1396
      $region34: #{unet_downsample.3} parent=27 // pred_check_branch
        %1399 = sbr.rel (%p1397) target = $region36
      $region35: #{unet_downsample.3} parent=27 // pred_region
        %v1400 = vld [vmem:[%s3] sm:$0x3]
        %v1401 = vadd.f32 %v1400, %v1389
        %vm1402 = vcmask 58368
        %1403 = vst.msk [vmem:[%s3] sm:$0x3] %vm1402, %v1401
      $region36: #{unet_downsample.3} parent=27 // pred_fallthru
        _
      %p1404 = scmp.lt.s32.totalorder %s15, 1
      %s1405 = scalar_select %p1404, %s15, 1
      %s1406 = smul.addr %s1405, 8
      %s1407 = smul.addr %s1406, 8
      %s1408 = scalar_lea.vmem %s2, %s1407
      // Predicated region
      $region37: #{unet_downsample.3} parent=27 // pred_check
        %p1409 = pneg %p80
      $region38: #{unet_downsample.3} parent=27 // pred_check_branch
        %1411 = sbr.rel (%p1409) target = $region40
      $region39: #{unet_downsample.3} parent=27 // pred_region
        _
      $region40: #{unet_downsample.3} parent=27 // pred_fallthru
        _
      // Predicated region
      $region41: #{unet_downsample.3} parent=27 // pred_check
        %p1412 = pneg %p101
      $region42: #{unet_downsample.3} parent=27 // pred_check_branch
        %1414 = sbr.rel (%p1412) target = $region44
      $region43: #{unet_downsample.3} parent=27 // pred_region
        _
      $region44: #{unet_downsample.3} parent=27 // pred_fallthru
        _
      // Predicated region
      $region45: #{unet_downsample.3} parent=27 // pred_check
        %p1415 = pneg %p101
      $region46: #{unet_downsample.3} parent=27 // pred_check_branch
        %1417 = sbr.rel (%p1415) target = $region48
      $region47: #{unet_downsample.3} parent=27 // pred_region
        _
      $region48: #{unet_downsample.3} parent=27 // pred_fallthru
        _
    $region28: #{unet_downsample.3} parent=5 // pred_fallthru
      _
    %p1418 = scmp.le.s32.totalorder 2, %s10
    // Predicated region
    $region49: #{unet_downsample.3} parent=5 // pred_check
      %p1419 = pneg %p1418
    $region50: #{unet_downsample.3} parent=5 // pred_check_branch
      %1421 = sbr.rel (%p1419) target = $region52
    $region51: #{unet_downsample.3} parent=5 // pred_region
      %s1422 = ssub.s32 %s10, 2
      // Predicated region
      $region53: #{unet_downsample.3} parent=51 // pred_check
        %p1423 = pneg %p86
      $region54: #{unet_downsample.3} parent=51 // pred_check_branch
        %1425 = sbr.rel (%p1423) target = $region56
      $region55: #{unet_downsample.3} parent=51 // pred_region
        %p1426 = scmp.lt.s32.totalorder %s16, 1
        %s1427 = scalar_select %p1426, %s16, 1
        %s1428 = smul.addr %s1427, 8
        %s1429 = smul.addr %s1428, 8
        %s1430 = scalar_lea.vmem %s2, %s1429
      $region56: #{unet_downsample.3} parent=51 // pred_fallthru
        _
    $region52: #{unet_downsample.3} parent=5 // pred_fallthru
      _
  $region6: #{unet_downsample.3} parent=0 // loop_footer
    %s14 = sadd.s32 1, %s10
  $region7: #{unet_downsample.3} parent=0 // loop_footer_branch
    %9 = sbr.rel target = $region3
  $region8: #{unet_downsample.3} parent=0 // loop_exit
    _

// kernel: unet_downsample.4
$region0: #{unet_downsample.4}
  #allocation0 [shape = 'u32[]', space=smem, size = 0x4, offset = 0x4, fixed_abs, tag = 'smem constant byte address 0x4 - core index']
  #allocation1 [shape = 'u32[144,128]{1,0:T(1,128)}', space=vmem, size = 0x12000, scoped, tag = 'internal scratch']
  #allocation2 [shape = 'bf16[10,10,8]{2,1,0:T(8,128)(2,1)}', space=vmem, size = 0xa000, scoped, tag = 'scratch operand']
  %s0 = inlined_call_operand.vmem [shape: f32[2,8,8,8], index: 0, kind: input, shape index: {}]
  %s1 = inlined_call_operand.vmem [shape: f32[1,8], index: 1, kind: input, shape index: {}]
  %s2 = inlined_call_operand.vmem [shape: f32[1,8], index: 2, kind: input, shape index: {}]
  %s3 = inlined_call_operand.vmem [shape: bf16[72,8], index: 3, kind: input, shape index: {}]
  %s4 = inlined_call_operand.vmem [shape: f32[2,8,8,8], index: 4, kind: output, shape index: {0}]
  %s5 = inlined_call_operand.vmem [shape: f32[2,8], index: 5, kind: output, shape index: {1}]
  %6 = xla_tuple %s4, %s5
  %s7 = sld [smem:[#allocation0]]
  $region65: #{unet_downsample.4} parent=0
    _
  %s9 = ssub.s32 1, %s7
  %s10 = scalar_select 0, %s9, %s7
  loop: start=0, step=1, limit=4
  $region2: #{unet_downsample.4} parent=0 // loop_pre_header
    _
  $region3: #{unet_downsample.4} parent=0 // loop_header
    %s12 = sphi 0, %s16
    %p13 = scmp.ge.s32.totalorder %s12, 4
    %s22 = sphi 0, %s24
    %s25 = sphi 0, %s22
    %s26 = sphi 0, %s25
    %s42 = sphi 0, %s26
    %s46 = sphi 0, %s46
    %s48 = sphi 0, %s46
    %s49 = sphi 0, %s48
    %s63 = sphi 0, %s49
    %s67 = sphi 0, %s67
    %s69 = sphi 0, %s67
    %s70 = sphi 0, %s69
    %s84 = sphi 0, %s70
    %s88 = sphi 0, %s88
    %s90 = sphi 0, %s88
    %s91 = sphi 0, %s90
    %s105 = sphi 0, %s91
    %s111 = sphi 0, %s113
    %s114 = sphi 0, %s111
    %s115 = sphi 0, %s114
    %s131 = sphi 0, %s115
    %s135 = sphi 0, %s135
    %s137 = sphi 0, %s135
    %s138 = sphi 0, %s137
    %s152 = sphi 0, %s138
  $region4: #{unet_downsample.4} parent=0 // loop_header_branch
    %15 = sbr.rel (%p13) target = $region8
  $region5: #{unet_downsample.4} parent=0 // loop_body
    %s17 = ssub.s32 %s12, 1
    %s18 = ssub.s32 %s12, 2
    %s19 = sadd.s32 %s12, 1
    %s20 = ssub.s32 %s12, %s19
    %p21 = scmp.eq.s32.totalorder %s20, 0
    %s23 = sadd.s32 %s22, 1
    %s24 = scalar_select %p21, %s22, %s23
    %p27 = pneg %p21
    %p28 = scmp.eq.s32.totalorder %s12, 1
    %p29 = por %p27, %p28
    %p30 = scmp.ne.s32.totalorder %s22, %s25
    %p31 = scmp.eq.s32.totalorder %s12, 0
    %p32 = por %p30, %p31
    %p33 = scmp.ne.s32.totalorder %s22, %s25
    %p34 = scmp.eq.s32.totalorder %s17, 1
    %p35 = por %p33, %p34
    %p36 = scmp.ne.s32.totalorder %s25, %s26
    %p37 = scmp.eq.s32.totalorder %s17, 0
    %p38 = por %p36, %p37
    %p39 = scmp.ne.s32.totalorder %s25, %s26
    %p40 = scmp.eq.s32.totalorder %s18, 1
    %p41 = por %p39, %p40
    %p43 = scmp.ne.s32.totalorder %s26, %s42
    %p44 = scmp.eq.s32.totalorder %s18, 0
    %p45 = por %p43, %p44
    %s47 = sadd.s32 %s46, 1
    %p50 = scmp.eq.s32.totalorder %s12, 1
    %p51 = scmp.ne.s32.totalorder %s46, %s48
    %p52 = scmp.eq.s32.totalorder %s12, 0
    %p53 = por %p51, %p52
    %p54 = scmp.ne.s32.totalorder %s46, %s48
    %p55 = scmp.eq.s32.totalorder %s17, 1
    %p56 = por %p54, %p55
    %p57 = scmp.ne.s32.totalorder %s48, %s49
    %p58 = scmp.eq.s32.totalorder %s17, 0
    %p59 = por %p57, %p58
    %p60 = scmp.ne.s32.totalorder %s48, %s49
    %p61 = scmp.eq.s32.totalorder %s18, 1
    %p62 = por %p60, %p61
    %p64 = scmp.ne.s32.totalorder %s49, %s63
    %p65 = scmp.eq.s32.totalorder %s18, 0
    %p66 = por %p64, %p65
    %s68 = sadd.s32 %s67, 1
    %p71 = scmp.eq.s32.totalorder %s12, 1
    %p72 = scmp.ne.s32.totalorder %s67, %s69
    %p73 = scmp.eq.s32.totalorder %s12, 0
    %p74 = por %p72, %p73
    %p75 = scmp.ne.s32.totalorder %s67, %s69
    %p76 = scmp.eq.s32.totalorder %s17, 1
    %p77 = por %p75, %p76
    %p78 = scmp.ne.s32.totalorder %s69, %s70
    %p79 = scmp.eq.s32.totalorder %s17, 0
    %p80 = por %p78, %p79
    %p81 = scmp.ne.s32.totalorder %s69, %s70
    %p82 = scmp.eq.s32.totalorder %s18, 1
    %p83 = por %p81, %p82
    %p85 = scmp.ne.s32.totalorder %s70, %s84
    %p86 = scmp.eq.s32.totalorder %s18, 0
    %p87 = por %p85, %p86
    %s89 = sadd.s32 %s88, 1
    %p92 = scmp.eq.s32.totalorder %s12, 1
    %p93 = scmp.ne.s32.totalorder %s88, %s90
    %p94 = scmp.eq.s32.totalorder %s12, 0
    %p95 = por %p93, %p94
    %p96 = scmp.ne.s32.totalorder %s88, %s90
    %p97 = scmp.eq.s32.totalorder %s17, 1
    %p98 = por %p96, %p97
    %p99 = scmp.ne.s32.totalorder %s90, %s91
    %p100 = scmp.eq.s32.totalorder %s17, 0
    %p101 = por %p99, %p100
    %p102 = scmp.ne.s32.totalorder %s90, %s91
    %p103 = scmp.eq.s32.totalorder %s18, 1
    %p104 = por %p102, %p103
    %p106 = scmp.ne.s32.totalorder %s91, %s105
    %p107 = scmp.eq.s32.totalorder %s18, 0
    %p108 = por %p106, %p107
    %s109 = ssub.s32 %s12, %s19
    %p110 = scmp.eq.s32.totalorder %s109, 0
    %s112 = sadd.s32 %s111, 1
    %s113 = scalar_select %p110, %s111, %s112
    %p116 = pneg %p110
    %p117 = scmp.eq.s32.totalorder %s12, 1
    %p118 = por %p116, %p117
    %p119 = scmp.ne.s32.totalorder %s111, %s114
    %p120 = scmp.eq.s32.totalorder %s12, 0
    %p121 = por %p119, %p120
    %p122 = scmp.ne.s32.totalorder %s111, %s114
    %p123 = scmp.eq.s32.totalorder %s17, 1
    %p124 = por %p122, %p123
    %p125 = scmp.ne.s32.totalorder %s114, %s115
    %p126 = scmp.eq.s32.totalorder %s17, 0
    %p127 = por %p125, %p126
    %p128 = scmp.ne.s32.totalorder %s114, %s115
    %p129 = scmp.eq.s32.totalorder %s18, 1
    %p130 = por %p128, %p129
    %p132 = scmp.ne.s32.totalorder %s115, %s131
    %p133 = scmp.eq.s32.totalorder %s18, 0
    %p134 = por %p132, %p133
    %s136 = sadd.s32 %s135, 1
    %p139 = scmp.eq.s32.totalorder %s12, 1
    %p140 = scmp.ne.s32.totalorder %s135, %s137
    %p141 = scmp.eq.s32.totalorder %s12, 0
    %p142 = por %p140, %p141
    %p143 = scmp.ne.s32.totalorder %s135, %s137
    %p144 = scmp.eq.s32.totalorder %s17, 1
    %p145 = por %p143, %p144
    %p146 = scmp.ne.s32.totalorder %s137, %s138
    %p147 = scmp.eq.s32.totalorder %s17, 0
    %p148 = por %p146, %p147
    %p149 = scmp.ne.s32.totalorder %s137, %s138
    %p150 = scmp.eq.s32.totalorder %s18, 1
    %p151 = por %p149, %p150
    %p153 = scmp.ne.s32.totalorder %s138, %s152
    %p154 = scmp.eq.s32.totalorder %s18, 0
    %p155 = por %p153, %p154
    %p156 = scmp.le.s32.totalorder 1, %s12
    %p157 = scmp.lt.s32.totalorder %s12, 3
    %p158 = pnand %p156, %p157
    %p159 = pneg %p158
    // Predicated region
    $region9: #{unet_downsample.4} parent=5 // pred_check
      _
    $region10: #{unet_downsample.4} parent=5 // pred_check_branch
      %161 = sbr.rel (%p158) target = $region12
    $region11: #{unet_downsample.4} parent=5 // pred_region
      %s162 = ssub.s32 %s12, 1
      // Predicated region
      $region13: #{unet_downsample.4} parent=11 // pred_check
        %p163 = pneg %p59
      $region14: #{unet_downsample.4} parent=11 // pred_check_branch
        %165 = sbr.rel (%p163) target = $region16
      $region15: #{unet_downsample.4} parent=11 // pred_region
        _
      $region16: #{unet_downsample.4} parent=11 // pred_fallthru
        _
      // Predicated region
      $region17: #{unet_downsample.4} parent=11 // pred_check
        %p166 = pneg %p80
      $region18: #{unet_downsample.4} parent=11 // pred_check_branch
        %168 = sbr.rel (%p166) target = $region20
      $region19: #{unet_downsample.4} parent=11 // pred_region
        _
      $region20: #{unet_downsample.4} parent=11 // pred_fallthru
        _
      // Predicated region
      $region21: #{unet_downsample.4} parent=11 // pred_check
        %p169 = pneg %p101
      $region22: #{unet_downsample.4} parent=11 // pred_check_branch
        %171 = sbr.rel (%p169) target = $region24
      $region23: #{unet_downsample.4} parent=11 // pred_region
        _
      $region24: #{unet_downsample.4} parent=11 // pred_fallthru
        _
    $region12: #{unet_downsample.4} parent=5 // pred_fallthru
      _
    %p172 = scmp.lt.s32.totalorder %s12, 2
    // Predicated region
    $region25: #{unet_downsample.4} parent=5 // pred_check
      %p173 = pneg %p172
    $region26: #{unet_downsample.4} parent=5 // pred_check_branch
      %175 = sbr.rel (%p173) target = $region28
    $region27: #{unet_downsample.4} parent=5 // pred_region
      // Predicated region
      $region29: #{unet_downsample.4} parent=27 // pred_check
        %p176 = pneg %p32
      $region30: #{unet_downsample.4} parent=27 // pred_check_branch
        %178 = sbr.rel (%p176) target = $region32
      $region31: #{unet_downsample.4} parent=27 // pred_region
        %p179 = scmp.lt.s32.totalorder %s12, 1
        %s180 = scalar_select %p179, %s12, 1
        %s181 = smul.addr %s180, 8
        %s182 = smul.addr %s181, 8
        %s183 = scalar_lea.vmem %s0, %s182
      $region32: #{unet_downsample.4} parent=27 // pred_fallthru
        _
    $region28: #{unet_downsample.4} parent=5 // pred_fallthru
      _
    %p184 = scmp.le.s32.totalorder 1, %s12
    %p185 = scmp.lt.s32.totalorder %s12, 3
    %p186 = pnand %p184, %p185
    %p187 = pneg %p186
    // Predicated region
    $region33: #{unet_downsample.4} parent=5 // pred_check
      _
    $region34: #{unet_downsample.4} parent=5 // pred_check_branch
      %189 = sbr.rel (%p186) target = $region36
    $region35: #{unet_downsample.4} parent=5 // pred_region
      %s190 = ssub.s32 %s12, 1
      %p191 = scmp.lt.s32.totalorder %s17, 1
      %s192 = scalar_select %p191, %s17, 1
      %s193 = smul.addr %s192, 8
      %s194 = smul.addr %s193, 8
      %s195 = scalar_lea.vmem %s0, %s194
      %p196 = pneg %p38
      %p197 = pneg %p35
      %p198 = pneg %p59
      %p199 = pneg %p56
      %p200 = pneg %p80
      %p201 = pneg %p77
      %p202 = pneg %p101
      %p203 = pneg %p98
      %p204 = pneg %p127
      %p205 = pneg %p124
      %p206 = scmp.lt.s32.totalorder %s17, 1
      %s207 = scalar_select %p206, %s17, 1
      %s208 = smul.addr %s207, 8
      %s209 = smul.addr %s208, 8
      %s210 = scalar_lea.vmem %s4, %s209
      %p211 = pneg %p148
      %p212 = pneg %p145
      %p213 = scmp.lt.s32.totalorder %s17, 1
      %s214 = scalar_select %p213, %s17, 1
      %s215 = smul.addr %s214, 8
      %s216 = smul.addr %s215, 8
      %s217 = scalar_lea.vmem %s0, %s216
      %p218 = scmp.lt.s32.totalorder %s17, 1
      %s219 = scalar_select %p218, %s17, 1
      %s220 = smul.addr %s219, 8
      %s221 = smul.addr %s220, 8
      %s222 = scalar_lea.vmem %s4, %s221
      %v224 = vld [vmem:[%s217] sm:$0xff]
      %v225 = vld [vmem:[%s217 + $0x8] sm:$0xff]
      %v226 = vld [vmem:[%s217 + $0x10] sm:$0xff]
      %v227 = vld [vmem:[%s217 + $0x18] sm:$0xff]
      %v228 = vld [vmem:[%s217 + $0x20] sm:$0xff]
      %v229 = vld [vmem:[%s217 + $0x28] sm:$0xff]
      %v230 = vld [vmem:[%s217 + $0x30] sm:$0xff]
      %v231 = vld [vmem:[%s217 + $0x38] sm:$0xff]
      %v232 = vld [vmem:[%s1] sm:$0x1]
      %v234 = vlaneseq
      %v235 = vshrl.u32 %v234, 7
      %v236 = vsub.s32 0, %v235
      %v237 = vrot.slane %v232, %v236
      %v239 = vmul.f32 %v224, %v237
      %v240 = vmul.f32 %v225, %v237
      %v241 = vmul.f32 %v226, %v237
      %v242 = vmul.f32 %v227, %v237
      %v243 = vmul.f32 %v228, %v237
      %v244 = vmul.f32 %v229, %v237
      %v245 = vmul.f32 %v230, %v237
      %v246 = vmul.f32 %v231, %v237
      %v247 = vld [vmem:[%s2] sm:$0x1]
      %v249 = vlaneseq
      %v250 = vshrl.u32 %v249, 7
      %v251 = vsub.s32 0, %v250
      %v252 = vrot.slane %v247, %v251
      %v254 = vadd.f32 %v239, %v252
      %v255 = vadd.f32 %v240, %v252
      %v256 = vadd.f32 %v241, %v252
      %v257 = vadd.f32 %v242, %v252
      %v258 = vadd.f32 %v243, %v252
      %v259 = vadd.f32 %v244, %v252
      %v260 = vadd.f32 %v245, %v252
      %v261 = vadd.f32 %v246, %v252
      %v262 = vmax.f32 %v254, 0.0
      %v263 = vmax.f32 %v255, 0.0
      %v264 = vmax.f32 %v256, 0.0
      %v265 = vmax.f32 %v257, 0.0
      %v266 = vmax.f32 %v258, 0.0
      %v267 = vmax.f32 %v259, 0.0
      %v268 = vmax.f32 %v260, 0.0
      %v269 = vmax.f32 %v261, 0.0
      %vm270 = vcmask 60416
      %271 = vst.msk [vmem:[#allocation2] sm:$0xf] %vm270, 0
      %vm272 = vcmask 57344
      %273 = vst.msk [vmem:[#allocation2 + $0x4] sm:$0x1] %vm272, 0
      %274 = vst.msk [vmem:[#allocation2 + $0x8] sm:$0xf] %vm270, 0
      %275 = vst.msk [vmem:[#allocation2 + $0xc] sm:$0x1] %vm272, 0
      %276 = vst.msk [vmem:[#allocation2 + $0x10] sm:$0xf] %vm270, 0
      %277 = vst.msk [vmem:[#allocation2 + $0x14] sm:$0x1] %vm272, 0
      %278 = vst.msk [vmem:[#allocation2 + $0x18] sm:$0xf] %vm270, 0
      %279 = vst.msk [vmem:[#allocation2 + $0x1c] sm:$0x1] %vm272, 0
      %280 = vst.msk [vmem:[#allocation2 + $0x20] sm:$0xf] %vm270, 0
      %281 = vst.msk [vmem:[#allocation2 + $0x24] sm:$0x1] %vm272, 0
      %282 = vst.msk [vmem:[#allocation2 + $0x28] sm:$0xf] %vm270, 0
      %283 = vst.msk [vmem:[#allocation2 + $0x2c] sm:$0x1] %vm272, 0
      %284 = vst.msk [vmem:[#allocation2 + $0x30] sm:$0xf] %vm270, 0
      %285 = vst.msk [vmem:[#allocation2 + $0x34] sm:$0x1] %vm272, 0
      %286 = vst.msk [vmem:[#allocation2 + $0x38] sm:$0xf] %vm270, 0
      %287 = vst.msk [vmem:[#allocation2 + $0x3c] sm:$0x1] %vm272, 0
      %288 = vst.msk [vmem:[#allocation2 + $0x40] sm:$0xf] %vm270, 0
      %289 = vst.msk [vmem:[#allocation2 + $0x44] sm:$0x1] %vm272, 0
      %290 = vst.msk [vmem:[#allocation2 + $0x48] sm:$0xf] %vm270, 0
      %291 = vst.msk [vmem:[#allocation2 + $0x4c] sm:$0x1] %vm272, 0
      %v292 = vpack.c.bf16 %v262, %v262
      %v293 = vpack.c.bf16 %v263, %v263
      %v294 = vpack.c.bf16 %v264, %v264
      %v295 = vpack.c.bf16 %v265, %v265
      %v296 = vpack.c.bf16 %v266, %v266
      %v297 = vpack.c.bf16 %v267, %v267
      %v298 = vpack.c.bf16 %v268, %v268
      %v299 = vpack.c.bf16 %v269, %v269
      %v308 = vunpack.c.l.b16 %v292
      %v309 = vunpack.c.l.b16 %v293
      %v310 = vunpack.c.l.b16 %v294
      %v311 = vunpack.c.l.b16 %v295
      %v312 = vunpack.c.l.b16 %v296
      %v313 = vunpack.c.l.b16 %v297
      %v314 = vunpack.c.l.b16 %v298
      %v315 = vunpack.c.l.b16 %v299
      %v316 = vpack.c.b16 %v308, %v308
      %v317 = vpack.c.b16 %v309, %v309
      %v318 = vpack.c.b16 %v310, %v310
      %v319 = vpack.c.b16 %v311, %v311
      %v320 = vpack.c.b16 %v312, %v312
      %v321 = vpack.c.b16 %v313, %v313
      %v322 = vpack.c.b16 %v314, %v314
      %v323 = vpack.c.b16 %v315, %v315
      %v325 = vshrl.u32 %v316, 16
      %v327 = vrot.slane %v325, 7
      %v328 = vshll.u32 %v316, 16
      %v330 = vor.u32 %v327, %v328
      %v331 = vrot.slane %v327, 4
      %v333 = vshrl.u32 %v317, 16
      %v335 = vrot.slane %v333, 7
      %v336 = vshll.u32 %v317, 16
      %v338 = vor.u32 %v335, %v336
      %v339 = vrot.slane %v335, 4
      %v341 = vshrl.u32 %v318, 16
      %v343 = vrot.slane %v341, 7
      %v344 = vshll.u32 %v318, 16
      %v346 = vor.u32 %v343, %v344
      %v347 = vrot.slane %v343, 4
      %v349 = vshrl.u32 %v319, 16
      %v351 = vrot.slane %v349, 7
      %v352 = vshll.u32 %v319, 16
      %v354 = vor.u32 %v351, %v352
      %v355 = vrot.slane %v351, 4
      %v357 = vshrl.u32 %v320, 16
      %v359 = vrot.slane %v357, 7
      %v360 = vshll.u32 %v320, 16
      %v362 = vor.u32 %v359, %v360
      %v363 = vrot.slane %v359, 4
      %v365 = vshrl.u32 %v321, 16
      %v367 = vrot.slane %v365, 7
      %v368 = vshll.u32 %v321, 16
      %v370 = vor.u32 %v367, %v368
      %v371 = vrot.slane %v367, 4
      %v373 = vshrl.u32 %v322, 16
      %v375 = vrot.slane %v373, 7
      %v376 = vshll.u32 %v322, 16
      %v378 = vor.u32 %v375, %v376
      %v379 = vrot.slane %v375, 4
      %v381 = vshrl.u32 %v323, 16
      %v383 = vrot.slane %v381, 7
      %v384 = vshll.u32 %v323, 16
      %v386 = vor.u32 %v383, %v384
      %v387 = vrot.slane %v383, 4
      %s404 = scalar_lea.vmem [#allocation2], 8
      %vm405 = vcmask 60416
      %vm406 = vsmask.f32 7938
      %vm407 = vmand %vm405, %vm406
      %v408 = vld [vmem:[%s404] sm:$0xf]
      %v409 = vsel %vm407, %v330, %v408
      %410 = vst [vmem:[%s404] sm:$0xf] %v409
      %vm411 = vcmask 57344
      %vm412 = vsmask.f32 256
      %vm413 = vmand %vm411, %vm412
      %v414 = vld [vmem:[%s404 + $0x4] sm:$0x1]
      %v415 = vsel %vm413, %v331, %v414
      %416 = vst [vmem:[%s404 + $0x4] sm:$0x1] %v415
      %v417 = vld [vmem:[%s404 + $0x8] sm:$0xf]
      %v418 = vsel %vm407, %v338, %v417
      %419 = vst [vmem:[%s404 + $0x8] sm:$0xf] %v418
      %v420 = vld [vmem:[%s404 + $0xc] sm:$0x1]
      %v421 = vsel %vm413, %v339, %v420
      %422 = vst [vmem:[%s404 + $0xc] sm:$0x1] %v421
      %v423 = vld [vmem:[%s404 + $0x10] sm:$0xf]
      %v424 = vsel %vm407, %v346, %v423
      %425 = vst [vmem:[%s404 + $0x10] sm:$0xf] %v424
      %v426 = vld [vmem:[%s404 + $0x14] sm:$0x1]
      %v427 = vsel %vm413, %v347, %v426
      %428 = vst [vmem:[%s404 + $0x14] sm:$0x1] %v427
      %v429 = vld [vmem:[%s404 + $0x18] sm:$0xf]
      %v430 = vsel %vm407, %v354, %v429
      %431 = vst [vmem:[%s404 + $0x18] sm:$0xf] %v430
      %v432 = vld [vmem:[%s404 + $0x1c] sm:$0x1]
      %v433 = vsel %vm413, %v355, %v432
      %434 = vst [vmem:[%s404 + $0x1c] sm:$0x1] %v433
      %v435 = vld [vmem:[%s404 + $0x20] sm:$0xf]
      %v436 = vsel %vm407, %v362, %v435
      %437 = vst [vmem:[%s404 + $0x20] sm:$0xf] %v436
      %v438 = vld [vmem:[%s404 + $0x24] sm:$0x1]
      %v439 = vsel %vm413, %v363, %v438
      %440 = vst [vmem:[%s404 + $0x24] sm:$0x1] %v439
      %v441 = vld [vmem:[%s404 + $0x28] sm:$0xf]
      %v442 = vsel %vm407, %v370, %v441
      %443 = vst [vmem:[%s404 + $0x28] sm:$0xf] %v442
      %v444 = vld [vmem:[%s404 + $0x2c] sm:$0x1]
      %v445 = vsel %vm413, %v371, %v444
      %446 = vst [vmem:[%s404 + $0x2c] sm:$0x1] %v445
      %v447 = vld [vmem:[%s404 + $0x30] sm:$0xf]
      %v448 = vsel %vm407, %v378, %v447
      %449 = vst [vmem:[%s404 + $0x30] sm:$0xf] %v448
      %v450 = vld [vmem:[%s404 + $0x34] sm:$0x1]
      %v451 = vsel %vm413, %v379, %v450
      %452 = vst [vmem:[%s404 + $0x34] sm:$0x1] %v451
      %v453 = vld [vmem:[%s404 + $0x38] sm:$0xf]
      %v454 = vsel %vm407, %v386, %v453
      %455 = vst [vmem:[%s404 + $0x38] sm:$0xf] %v454
      %v456 = vld [vmem:[%s404 + $0x3c] sm:$0x1]
      %v457 = vsel %vm413, %v387, %v456
      %458 = vst [vmem:[%s404 + $0x3c] sm:$0x1] %v457
      %v459 = vld [vmem:[#allocation2] sm:$0xf]
      %v460 = vld [vmem:[#allocation2 + $0x8] sm:$0xf]
      %v461 = vld [vmem:[#allocation2 + $0x10] sm:$0xf]
      %v462 = vld [vmem:[#allocation2 + $0x18] sm:$0xf]
      %v463 = vld [vmem:[#allocation2 + $0x20] sm:$0xf]
      %v464 = vld [vmem:[#allocation2 + $0x28] sm:$0xf]
      %v465 = vld [vmem:[#allocation2 + $0x30] sm:$0xf]
      %v466 = vld [vmem:[#allocation2 + $0x38] sm:$0xf]
      %v467 = vld [vmem:[#allocation2 + $0x4] sm:$0x1]
      %v468 = vld [vmem:[#allocation2 + $0xc] sm:$0x1]
      %v469 = vld [vmem:[#allocation2 + $0x14] sm:$0x1]
      %v470 = vld [vmem:[#allocation2 + $0x1c] sm:$0x1]
      %v471 = vld [vmem:[#allocation2 + $0x24] sm:$0x1]
      %v472 = vld [vmem:[#allocation2 + $0x2c] sm:$0x1]
      %v473 = vld [vmem:[#allocation2 + $0x34] sm:$0x1]
      %v474 = vld [vmem:[#allocation2 + $0x3c] sm:$0x1]
      %v475 = vld [vmem:[#allocation2] sm:$0xe]
      %v476 = vld [vmem:[#allocation2 + $0x8] sm:$0xe]
      %v477 = vld [vmem:[#allocation2 + $0x10] sm:$0xe]
      %v478 = vld [vmem:[#allocation2 + $0x18] sm:$0xe]
      %v479 = vld [vmem:[#allocation2 + $0x20] sm:$0xe]
      %v480 = vld [vmem:[#allocation2 + $0x28] sm:$0xe]
      %v481 = vld [vmem:[#allocation2 + $0x30] sm:$0xe]
      %v482 = vld [vmem:[#allocation2 + $0x38] sm:$0xe]
      %v483 = vld [vmem:[%s404] sm:$0xf]
      %v484 = vld [vmem:[%s404 + $0x8] sm:$0xf]
      %v485 = vld [vmem:[%s404 + $0x10] sm:$0xf]
      %v486 = vld [vmem:[%s404 + $0x18] sm:$0xf]
      %v487 = vld [vmem:[%s404 + $0x20] sm:$0xf]
      %v488 = vld [vmem:[%s404 + $0x28] sm:$0xf]
      %v489 = vld [vmem:[%s404 + $0x30] sm:$0xf]
      %v490 = vld [vmem:[%s404 + $0x38] sm:$0xf]
      %v491 = vld [vmem:[%s404 + $0x4] sm:$0x1]
      %v492 = vld [vmem:[%s404 + $0xc] sm:$0x1]
      %v493 = vld [vmem:[%s404 + $0x14] sm:$0x1]
      %v494 = vld [vmem:[%s404 + $0x1c] sm:$0x1]
      %v495 = vld [vmem:[%s404 + $0x24] sm:$0x1]
      %v496 = vld [vmem:[%s404 + $0x2c] sm:$0x1]
      %v497 = vld [vmem:[%s404 + $0x34] sm:$0x1]
      %v498 = vld [vmem:[%s404 + $0x3c] sm:$0x1]
      %v499 = vld [vmem:[%s404] sm:$0xe]
      %v500 = vld [vmem:[%s404 + $0x8] sm:$0xe]
      %v501 = vld [vmem:[%s404 + $0x10] sm:$0xe]
      %v502 = vld [vmem:[%s404 + $0x18] sm:$0xe]
      %v503 = vld [vmem:[%s404 + $0x20] sm:$0xe]
      %v504 = vld [vmem:[%s404 + $0x28] sm:$0xe]
      %v505 = vld [vmem:[%s404 + $0x30] sm:$0xe]
      %v506 = vld [vmem:[%s404 + $0x38] sm:$0xe]
      %s507 = scalar_lea.vmem [#allocation2], 16
      %v508 = vld [vmem:[%s507] sm:$0xf]
      %v509 = vld [vmem:[%s507 + $0x8] sm:$0xf]
      %v510 = vld [vmem:[%s507 + $0x10] sm:$0xf]
      %v511 = vld [vmem:[%s507 + $0x18] sm:$0xf]
      %v512 = vld [vmem:[%s507 + $0x20] sm:$0xf]
      %v513 = vld [vmem:[%s507 + $0x28] sm:$0xf]
      %v514 = vld [vmem:[%s507 + $0x30] sm:$0xf]
      %v515 = vld [vmem:[%s507 + $0x38] sm:$0xf]
      %v516 = vld [vmem:[%s507 + $0x4] sm:$0x1]
      %v517 = vld [vmem:[%s507 + $0xc] sm:$0x1]
      %v518 = vld [vmem:[%s507 + $0x14] sm:$0x1]
      %v519 = vld [vmem:[%s507 + $0x1c] sm:$0x1]
      %v520 = vld [vmem:[%s507 + $0x24] sm:$0x1]
      %v521 = vld [vmem:[%s507 + $0x2c] sm:$0x1]
      %v522 = vld [vmem:[%s507 + $0x34] sm:$0x1]
      %v523 = vld [vmem:[%s507 + $0x3c] sm:$0x1]
      %v524 = vld [vmem:[%s507] sm:$0xe]
      %v525 = vld [vmem:[%s507 + $0x8] sm:$0xe]
      %v526 = vld [vmem:[%s507 + $0x10] sm:$0xe]
      %v527 = vld [vmem:[%s507 + $0x18] sm:$0xe]
      %v528 = vld [vmem:[%s507 + $0x20] sm:$0xe]
      %v529 = vld [vmem:[%s507 + $0x28] sm:$0xe]
      %v530 = vld [vmem:[%s507 + $0x30] sm:$0xe]
      %v531 = vld [vmem:[%s507 + $0x38] sm:$0xe]
      %v548 = vunpack.c.l.b16 %v459
      %v549 = vunpack.c.l.b16 %v467
      %v550 = vunpack.c.l.b16 %v460
      %v551 = vunpack.c.l.b16 %v468
      %v552 = vunpack.c.l.b16 %v461
      %v553 = vunpack.c.l.b16 %v469
      %v554 = vunpack.c.l.b16 %v462
      %v555 = vunpack.c.l.b16 %v470
      %v556 = vunpack.c.l.b16 %v463
      %v557 = vunpack.c.l.b16 %v471
      %v558 = vunpack.c.l.b16 %v464
      %v559 = vunpack.c.l.b16 %v472
      %v560 = vunpack.c.l.b16 %v465
      %v561 = vunpack.c.l.b16 %v473
      %v562 = vunpack.c.l.b16 %v466
      %v563 = vunpack.c.l.b16 %v474
      %v564 = vpack.c.b16 %v549, %v548
      %v565 = vpack.c.b16 %v551, %v550
      %v566 = vpack.c.b16 %v553, %v552
      %v567 = vpack.c.b16 %v555, %v554
      %v568 = vpack.c.b16 %v557, %v556
      %v569 = vpack.c.b16 %v559, %v558
      %v570 = vpack.c.b16 %v561, %v560
      %v571 = vpack.c.b16 %v563, %v562
      %v573 = vshrl.u32 %v564, 16
      %v575 = vshll.u32 %v564, 16
      %v577 = vrot.slane %v575, 1
      %v578 = vor.u32 %v573, %v577
      %v580 = vshrl.u32 %v565, 16
      %v582 = vshll.u32 %v565, 16
      %v584 = vrot.slane %v582, 1
      %v585 = vor.u32 %v580, %v584
      %v587 = vshrl.u32 %v566, 16
      %v589 = vshll.u32 %v566, 16
      %v591 = vrot.slane %v589, 1
      %v592 = vor.u32 %v587, %v591
      %v594 = vshrl.u32 %v567, 16
      %v596 = vshll.u32 %v567, 16
      %v598 = vrot.slane %v596, 1
      %v599 = vor.u32 %v594, %v598
      %v601 = vshrl.u32 %v568, 16
      %v603 = vshll.u32 %v568, 16
      %v605 = vrot.slane %v603, 1
      %v606 = vor.u32 %v601, %v605
      %v608 = vshrl.u32 %v569, 16
      %v610 = vshll.u32 %v569, 16
      %v612 = vrot.slane %v610, 1
      %v613 = vor.u32 %v608, %v612
      %v615 = vshrl.u32 %v570, 16
      %v617 = vshll.u32 %v570, 16
      %v619 = vrot.slane %v617, 1
      %v620 = vor.u32 %v615, %v619
      %v622 = vshrl.u32 %v571, 16
      %v624 = vshll.u32 %v571, 16
      %v626 = vrot.slane %v624, 1
      %v627 = vor.u32 %v622, %v626
      %628 = vrot.lane.b32.xlu0 %v578, 8
      %v629 = vpop.permute.xlu0 %628
      %630 = vrot.lane.b32.xlu0 %v585, 8
      %v631 = vpop.permute.xlu0 %630
      %632 = vrot.lane.b32.xlu0 %v592, 8
      %v633 = vpop.permute.xlu0 %632
      %634 = vrot.lane.b32.xlu0 %v599, 8
      %v635 = vpop.permute.xlu0 %634
      %636 = vrot.lane.b32.xlu0 %v606, 8
      %v637 = vpop.permute.xlu0 %636
      %638 = vrot.lane.b32.xlu0 %v613, 8
      %v639 = vpop.permute.xlu0 %638
      %640 = vrot.lane.b32.xlu0 %v620, 8
      %v641 = vpop.permute.xlu0 %640
      %642 = vrot.lane.b32.xlu0 %v627, 8
      %v643 = vpop.permute.xlu0 %642
      %v652 = vunpack.c.l.b16 %v475
      %v653 = vunpack.c.l.b16 %v476
      %v654 = vunpack.c.l.b16 %v477
      %v655 = vunpack.c.l.b16 %v478
      %v656 = vunpack.c.l.b16 %v479
      %v657 = vunpack.c.l.b16 %v480
      %v658 = vunpack.c.l.b16 %v481
      %v659 = vunpack.c.l.b16 %v482
      %v660 = vpack.c.b16 %v549, %v652
      %v661 = vpack.c.b16 %v551, %v653
      %v662 = vpack.c.b16 %v553, %v654
      %v663 = vpack.c.b16 %v555, %v655
      %v664 = vpack.c.b16 %v557, %v656
      %v665 = vpack.c.b16 %v559, %v657
      %v666 = vpack.c.b16 %v561, %v658
      %v667 = vpack.c.b16 %v563, %v659
      %v668 = vrot.slane %v660, 1
      %v669 = vrot.slane %v661, 1
      %v670 = vrot.slane %v662, 1
      %v671 = vrot.slane %v663, 1
      %v672 = vrot.slane %v664, 1
      %v673 = vrot.slane %v665, 1
      %v674 = vrot.slane %v666, 1
      %v675 = vrot.slane %v667, 1
      %676 = vrot.lane.b32.xlu0 %v668, 16
      %v677 = vpop.permute.xlu0 %676
      %678 = vrot.lane.b32.xlu0 %v669, 16
      %v679 = vpop.permute.xlu0 %678
      %680 = vrot.lane.b32.xlu0 %v670, 16
      %v681 = vpop.permute.xlu0 %680
      %682 = vrot.lane.b32.xlu0 %v671, 16
      %v683 = vpop.permute.xlu0 %682
      %684 = vrot.lane.b32.xlu0 %v672, 16
      %v685 = vpop.permute.xlu0 %684
      %686 = vrot.lane.b32.xlu0 %v673, 16
      %v687 = vpop.permute.xlu0 %686
      %688 = vrot.lane.b32.xlu0 %v674, 16
      %v689 = vpop.permute.xlu0 %688
      %690 = vrot.lane.b32.xlu0 %v675, 16
      %v691 = vpop.permute.xlu0 %690
      %v700 = vunpack.c.l.b16 %v483
      %v701 = vunpack.c.l.b16 %v484
      %v702 = vunpack.c.l.b16 %v485
      %v703 = vunpack.c.l.b16 %v486
      %v704 = vunpack.c.l.b16 %v487
      %v705 = vunpack.c.l.b16 %v488
      %v706 = vunpack.c.l.b16 %v489
      %v707 = vunpack.c.l.b16 %v490
      %v708 = vpack.c.b16 %v700, %v700
      %v709 = vpack.c.b16 %v701, %v701
      %v710 = vpack.c.b16 %v702, %v702
      %v711 = vpack.c.b16 %v703, %v703
      %v712 = vpack.c.b16 %v704, %v704
      %v713 = vpack.c.b16 %v705, %v705
      %v714 = vpack.c.b16 %v706, %v706
      %v715 = vpack.c.b16 %v707, %v707
      %716 = vrot.lane.b32.xlu0 %v708, 24
      %v717 = vpop.permute.xlu0 %716
      %718 = vrot.lane.b32.xlu0 %v709, 24
      %v719 = vpop.permute.xlu0 %718
      %720 = vrot.lane.b32.xlu0 %v710, 24
      %v721 = vpop.permute.xlu0 %720
      %722 = vrot.lane.b32.xlu0 %v711, 24
      %v723 = vpop.permute.xlu0 %722
      %724 = vrot.lane.b32.xlu0 %v712, 24
      %v725 = vpop.permute.xlu0 %724
      %726 = vrot.lane.b32.xlu0 %v713, 24
      %v727 = vpop.permute.xlu0 %726
      %728 = vrot.lane.b32.xlu0 %v714, 24
      %v729 = vpop.permute.xlu0 %728
      %730 = vrot.lane.b32.xlu0 %v715, 24
      %v731 = vpop.permute.xlu0 %730
      %v740 = vunpack.c.l.b16 %v491
      %v741 = vunpack.c.l.b16 %v492
      %v742 = vunpack.c.l.b16 %v493
      %v743 = vunpack.c.l.b16 %v494
      %v744 = vunpack.c.l.b16 %v495
      %v745 = vunpack.c.l.b16 %v496
      %v746 = vunpack.c.l.b16 %v497
      %v747 = vunpack.c.l.b16 %v498
      %v748 = vpack.c.b16 %v740, %v700
      %v749 = vpack.c.b16 %v741, %v701
      %v750 = vpack.c.b16 %v742, %v702
      %v751 = vpack.c.b16 %v743, %v703
      %v752 = vpack.c.b16 %v744, %v704
      %v753 = vpack.c.b16 %v745, %v705
      %v754 = vpack.c.b16 %v746, %v706
      %v755 = vpack.c.b16 %v747, %v707
      %v757 = vshrl.u32 %v748, 16
      %v759 = vshll.u32 %v748, 16
      %v761 = vrot.slane %v759, 1
      %v762 = vor.u32 %v757, %v761
      %v764 = vshrl.u32 %v749, 16
      %v766 = vshll.u32 %v749, 16
      %v768 = vrot.slane %v766, 1
      %v769 = vor.u32 %v764, %v768
      %v771 = vshrl.u32 %v750, 16
      %v773 = vshll.u32 %v750, 16
      %v775 = vrot.slane %v773, 1
      %v776 = vor.u32 %v771, %v775
      %v778 = vshrl.u32 %v751, 16
      %v780 = vshll.u32 %v751, 16
      %v782 = vrot.slane %v780, 1
      %v783 = vor.u32 %v778, %v782
      %v785 = vshrl.u32 %v752, 16
      %v787 = vshll.u32 %v752, 16
      %v789 = vrot.slane %v787, 1
      %v790 = vor.u32 %v785, %v789
      %v792 = vshrl.u32 %v753, 16
      %v794 = vshll.u32 %v753, 16
      %v796 = vrot.slane %v794, 1
      %v797 = vor.u32 %v792, %v796
      %v799 = vshrl.u32 %v754, 16
      %v801 = vshll.u32 %v754, 16
      %v803 = vrot.slane %v801, 1
      %v804 = vor.u32 %v799, %v803
      %v806 = vshrl.u32 %v755, 16
      %v808 = vshll.u32 %v755, 16
      %v810 = vrot.slane %v808, 1
      %v811 = vor.u32 %v806, %v810
      %812 = vrot.lane.b32.xlu0 %v762, 32
      %v813 = vpop.permute.xlu0 %812
      %814 = vrot.lane.b32.xlu0 %v769, 32
      %v815 = vpop.permute.xlu0 %814
      %816 = vrot.lane.b32.xlu0 %v776, 32
      %v817 = vpop.permute.xlu0 %816
      %818 = vrot.lane.b32.xlu0 %v783, 32
      %v819 = vpop.permute.xlu0 %818
      %820 = vrot.lane.b32.xlu0 %v790, 32
      %v821 = vpop.permute.xlu0 %820
      %822 = vrot.lane.b32.xlu0 %v797, 32
      %v823 = vpop.permute.xlu0 %822
      %824 = vrot.lane.b32.xlu0 %v804, 32
      %v825 = vpop.permute.xlu0 %824
      %826 = vrot.lane.b32.xlu0 %v811, 32
      %v827 = vpop.permute.xlu0 %826
      %v836 = vunpack.c.l.b16 %v499
      %v837 = vunpack.c.l.b16 %v500
      %v838 = vunpack.c.l.b16 %v501
      %v839 = vunpack.c.l.b16 %v502
      %v840 = vunpack.c.l.b16 %v503
      %v841 = vunpack.c.l.b16 %v504
      %v842 = vunpack.c.l.b16 %v505
      %v843 = vunpack.c.l.b16 %v506
      %v844 = vpack.c.b16 %v740, %v836
      %v845 = vpack.c.b16 %v741, %v837
      %v846 = vpack.c.b16 %v742, %v838
      %v847 = vpack.c.b16 %v743, %v839
      %v848 = vpack.c.b16 %v744, %v840
      %v849 = vpack.c.b16 %v745, %v841
      %v850 = vpack.c.b16 %v746, %v842
      %v851 = vpack.c.b16 %v747, %v843
      %v852 = vrot.slane %v844, 1
      %v853 = vrot.slane %v845, 1
      %v854 = vrot.slane %v846, 1
      %v855 = vrot.slane %v847, 1
      %v856 = vrot.slane %v848, 1
      %v857 = vrot.slane %v849, 1
      %v858 = vrot.slane %v850, 1
      %v859 = vrot.slane %v851, 1
      %860 = vrot.lane.b32.xlu0 %v852, 40
      %v861 = vpop.permute.xlu0 %860
      %862 = vrot.lane.b32.xlu0 %v853, 40
      %v863 = vpop.permute.xlu0 %862
      %864 = vrot.lane.b32.xlu0 %v854, 40
      %v865 = vpop.permute.xlu0 %864
      %866 = vrot.lane.b32.xlu0 %v855, 40
      %v867 = vpop.permute.xlu0 %866
      %868 = vrot.lane.b32.xlu0 %v856, 40
      %v869 = vpop.permute.xlu0 %868
      %870 = vrot.lane.b32.xlu0 %v857, 40
      %v871 = vpop.permute.xlu0 %870
      %872 = vrot.lane.b32.xlu0 %v858, 40
      %v873 = vpop.permute.xlu0 %872
      %874 = vrot.lane.b32.xlu0 %v859, 40
      %v875 = vpop.permute.xlu0 %874
      %v884 = vunpack.c.l.b16 %v508
      %v885 = vunpack.c.l.b16 %v509
      %v886 = vunpack.c.l.b16 %v510
      %v887 = vunpack.c.l.b16 %v511
      %v888 = vunpack.c.l.b16 %v512
      %v889 = vunpack.c.l.b16 %v513
      %v890 = vunpack.c.l.b16 %v514
      %v891 = vunpack.c.l.b16 %v515
      %v892 = vpack.c.b16 %v884, %v884
      %v893 = vpack.c.b16 %v885, %v885
      %v894 = vpack.c.b16 %v886, %v886
      %v895 = vpack.c.b16 %v887, %v887
      %v896 = vpack.c.b16 %v888, %v888
      %v897 = vpack.c.b16 %v889, %v889
      %v898 = vpack.c.b16 %v890, %v890
      %v899 = vpack.c.b16 %v891, %v891
      %900 = vrot.lane.b32.xlu0 %v892, 48
      %v901 = vpop.permute.xlu0 %900
      %902 = vrot.lane.b32.xlu0 %v893, 48
      %v903 = vpop.permute.xlu0 %902
      %904 = vrot.lane.b32.xlu0 %v894, 48
      %v905 = vpop.permute.xlu0 %904
      %906 = vrot.lane.b32.xlu0 %v895, 48
      %v907 = vpop.permute.xlu0 %906
      %908 = vrot.lane.b32.xlu0 %v896, 48
      %v909 = vpop.permute.xlu0 %908
      %910 = vrot.lane.b32.xlu0 %v897, 48
      %v911 = vpop.permute.xlu0 %910
      %912 = vrot.lane.b32.xlu0 %v898, 48
      %v913 = vpop.permute.xlu0 %912
      %914 = vrot.lane.b32.xlu0 %v899, 48
      %v915 = vpop.permute.xlu0 %914
      %v924 = vunpack.c.l.b16 %v516
      %v925 = vunpack.c.l.b16 %v517
      %v926 = vunpack.c.l.b16 %v518
      %v927 = vunpack.c.l.b16 %v519
      %v928 = vunpack.c.l.b16 %v520
      %v929 = vunpack.c.l.b16 %v521
      %v930 = vunpack.c.l.b16 %v522
      %v931 = vunpack.c.l.b16 %v523
      %v932 = vpack.c.b16 %v924, %v884
      %v933 = vpack.c.b16 %v925, %v885
      %v934 = vpack.c.b16 %v926, %v886
      %v935 = vpack.c.b16 %v927, %v887
      %v936 = vpack.c.b16 %v928, %v888
      %v937 = vpack.c.b16 %v929, %v889
      %v938 = vpack.c.b16 %v930, %v890
      %v939 = vpack.c.b16 %v931, %v891
      %v941 = vshrl.u32 %v932, 16
      %v943 = vshll.u32 %v932, 16
      %v945 = vrot.slane %v943, 1
      %v946 = vor.u32 %v941, %v945
      %v948 = vshrl.u32 %v933, 16
      %v950 = vshll.u32 %v933, 16
      %v952 = vrot.slane %v950, 1
      %v953 = vor.u32 %v948, %v952
      %v955 = vshrl.u32 %v934, 16
      %v957 = vshll.u32 %v934, 16
      %v959 = vrot.slane %v957, 1
      %v960 = vor.u32 %v955, %v959
      %v962 = vshrl.u32 %v935, 16
      %v964 = vshll.u32 %v935, 16
      %v966 = vrot.slane %v964, 1
      %v967 = vor.u32 %v962, %v966
      %v969 = vshrl.u32 %v936, 16
      %v971 = vshll.u32 %v936, 16
      %v973 = vrot.slane %v971, 1
      %v974 = vor.u32 %v969, %v973
      %v976 = vshrl.u32 %v937, 16
      %v978 = vshll.u32 %v937, 16
      %v980 = vrot.slane %v978, 1
      %v981 = vor.u32 %v976, %v980
      %v983 = vshrl.u32 %v938, 16
      %v985 = vshll.u32 %v938, 16
      %v987 = vrot.slane %v985, 1
      %v988 = vor.u32 %v983, %v987
      %v990 = vshrl.u32 %v939, 16
      %v992 = vshll.u32 %v939, 16
      %v994 = vrot.slane %v992, 1
      %v995 = vor.u32 %v990, %v994
      %996 = vrot.lane.b32.xlu0 %v946, 56
      %v997 = vpop.permute.xlu0 %996
      %998 = vrot.lane.b32.xlu0 %v953, 56
      %v999 = vpop.permute.xlu0 %998
      %1000 = vrot.lane.b32.xlu0 %v960, 56
      %v1001 = vpop.permute.xlu0 %1000
      %1002 = vrot.lane.b32.xlu0 %v967, 56
      %v1003 = vpop.permute.xlu0 %1002
      %1004 = vrot.lane.b32.xlu0 %v974, 56
      %v1005 = vpop.permute.xlu0 %1004
      %1006 = vrot.lane.b32.xlu0 %v981, 56
      %v1007 = vpop.permute.xlu0 %1006
      %1008 = vrot.lane.b32.xlu0 %v988, 56
      %v1009 = vpop.permute.xlu0 %1008
      %1010 = vrot.lane.b32.xlu0 %v995, 56
      %v1011 = vpop.permute.xlu0 %1010
      %v1020 = vunpack.c.l.b16 %v524
      %v1021 = vunpack.c.l.b16 %v525
      %v1022 = vunpack.c.l.b16 %v526
      %v1023 = vunpack.c.l.b16 %v527
      %v1024 = vunpack.c.l.b16 %v528
      %v1025 = vunpack.c.l.b16 %v529
      %v1026 = vunpack.c.l.b16 %v530
      %v1027 = vunpack.c.l.b16 %v531
      %v1028 = vpack.c.b16 %v924, %v1020
      %v1029 = vpack.c.b16 %v925, %v1021
      %v1030 = vpack.c.b16 %v926, %v1022
      %v1031 = vpack.c.b16 %v927, %v1023
      %v1032 = vpack.c.b16 %v928, %v1024
      %v1033 = vpack.c.b16 %v929, %v1025
      %v1034 = vpack.c.b16 %v930, %v1026
      %v1035 = vpack.c.b16 %v931, %v1027
      %v1036 = vrot.slane %v1028, 1
      %v1037 = vrot.slane %v1029, 1
      %v1038 = vrot.slane %v1030, 1
      %v1039 = vrot.slane %v1031, 1
      %v1040 = vrot.slane %v1032, 1
      %v1041 = vrot.slane %v1033, 1
      %v1042 = vrot.slane %v1034, 1
      %v1043 = vrot.slane %v1035, 1
      %1044 = vrot.lane.b32.xlu0 %v1036, 64
      %v1045 = vpop.permute.xlu0 %1044
      %1046 = vrot.lane.b32.xlu0 %v1037, 64
      %v1047 = vpop.permute.xlu0 %1046
      %1048 = vrot.lane.b32.xlu0 %v1038, 64
      %v1049 = vpop.permute.xlu0 %1048
      %1050 = vrot.lane.b32.xlu0 %v1039, 64
      %v1051 = vpop.permute.xlu0 %1050
      %1052 = vrot.lane.b32.xlu0 %v1040, 64
      %v1053 = vpop.permute.xlu0 %1052
      %1054 = vrot.lane.b32.xlu0 %v1041, 64
      %v1055 = vpop.permute.xlu0 %1054
      %1056 = vrot.lane.b32.xlu0 %v1042, 64
      %v1057 = vpop.permute.xlu0 %1056
      %1058 = vrot.lane.b32.xlu0 %v1043, 64
      %v1059 = vpop.permute.xlu0 %1058
      %vm1060 = vcmask 64512
      %v1063 = vsel %vm1060, %v459, %v629
      %v1066 = vsel %vm1060, %v460, %v631
      %v1069 = vsel %vm1060, %v461, %v633
      %v1072 = vsel %vm1060, %v462, %v635
      %v1075 = vsel %vm1060, %v463, %v637
      %v1078 = vsel %vm1060, %v464, %v639
      %v1081 = vsel %vm1060, %v465, %v641
      %v1084 = vsel %vm1060, %v466, %v643
      %vm1085 = vcmask 130048
      %v1087 = vsel %vm1085, %v1063, %v677
      %v1089 = vsel %vm1085, %v1066, %v679
      %v1091 = vsel %vm1085, %v1069, %v681
      %v1093 = vsel %vm1085, %v1072, %v683
      %v1095 = vsel %vm1085, %v1075, %v685
      %v1097 = vsel %vm1085, %v1078, %v687
      %v1099 = vsel %vm1085, %v1081, %v689
      %v1101 = vsel %vm1085, %v1084, %v691
      %vm1102 = vcmask 195584
      %v1104 = vsel %vm1102, %v1087, %v717
      %v1106 = vsel %vm1102, %v1089, %v719
      %v1108 = vsel %vm1102, %v1091, %v721
      %v1110 = vsel %vm1102, %v1093, %v723
      %v1112 = vsel %vm1102, %v1095, %v725
      %v1114 = vsel %vm1102, %v1097, %v727
      %v1116 = vsel %vm1102, %v1099, %v729
      %v1118 = vsel %vm1102, %v1101, %v731
      %vm1119 = vcmask 261120
      %v1121 = vsel %vm1119, %v1104, %v813
      %v1123 = vsel %vm1119, %v1106, %v815
      %v1125 = vsel %vm1119, %v1108, %v817
      %v1127 = vsel %vm1119, %v1110, %v819
      %v1129 = vsel %vm1119, %v1112, %v821
      %v1131 = vsel %vm1119, %v1114, %v823
      %v1133 = vsel %vm1119, %v1116, %v825
      %v1135 = vsel %vm1119, %v1118, %v827
      %vm1136 = vcmask 326656
      %v1138 = vsel %vm1136, %v1121, %v861
      %v1140 = vsel %vm1136, %v1123, %v863
      %v1142 = vsel %vm1136, %v1125, %v865
      %v1144 = vsel %vm1136, %v1127, %v867
      %v1146 = vsel %vm1136, %v1129, %v869
      %v1148 = vsel %vm1136, %v1131, %v871
      %v1150 = vsel %vm1136, %v1133, %v873
      %v1152 = vsel %vm1136, %v1135, %v875
      %vm1153 = vcmask 392192
      %v1155 = vsel %vm1153, %v1138, %v901
      %v1157 = vsel %vm1153, %v1140, %v903
      %v1159 = vsel %vm1153, %v1142, %v905
      %v1161 = vsel %vm1153, %v1144, %v907
      %v1163 = vsel %vm1153, %v1146, %v909
      %v1165 = vsel %vm1153, %v1148, %v911
      %v1167 = vsel %vm1153, %v1150, %v913
      %v1169 = vsel %vm1153, %v1152, %v915
      %vm1170 = vcmask 457728
      %v1172 = vsel %vm1170, %v1155, %v997
      %v1174 = vsel %vm1170, %v1157, %v999
      %v1176 = vsel %vm1170, %v1159, %v1001
      %v1178 = vsel %vm1170, %v1161, %v1003
      %v1180 = vsel %vm1170, %v1163, %v1005
      %v1182 = vsel %vm1170, %v1165, %v1007
      %v1184 = vsel %vm1170, %v1167, %v1009
      %v1186 = vsel %vm1170, %v1169, %v1011
      %vm1187 = vcmask 523264
      %v1189 = vsel %vm1187, %v1172, %v1045
      %v1191 = vsel %vm1187, %v1174, %v1047
      %v1193 = vsel %vm1187, %v1176, %v1049
      %v1195 = vsel %vm1187, %v1178, %v1051
      %v1197 = vsel %vm1187, %v1180, %v1053
      %v1199 = vsel %vm1187, %v1182, %v1055
      %v1201 = vsel %vm1187, %v1184, %v1057
      %v1203 = vsel %vm1187, %v1186, %v1059
      %v1204 = vld [vmem:[%s3] sm:$0xf]
      %v1205 = vld [vmem:[%s3 + $0x4] sm:$0xf]
      %v1206 = vld [vmem:[%s3 + $0x8] sm:$0xf]
      %v1207 = vld [vmem:[%s3 + $0xc] sm:$0xf]
      %v1208 = vld [vmem:[%s3 + $0x10] sm:$0xf]
      %v1209 = vld [vmem:[%s3 + $0x14] sm:$0xf]
      %v1210 = vld [vmem:[%s3 + $0x18] sm:$0xf]
      %v1211 = vld [vmem:[%s3 + $0x1c] sm:$0xf]
      %v1212 = vld [vmem:[%s3 + $0x20] sm:$0xf]
      %v1221 = vunpack.c.l.b16 %v1189
      %v1222 = vunpack.c.l.b16 %v1191
      %v1223 = vunpack.c.l.b16 %v1193
      %v1224 = vunpack.c.l.b16 %v1195
      %v1225 = vunpack.c.l.b16 %v1197
      %v1226 = vunpack.c.l.b16 %v1199
      %v1227 = vunpack.c.l.b16 %v1201
      %v1228 = vunpack.c.l.b16 %v1203
      %v1229 = vpack.c.b16 %v1222, %v1221
      %v1230 = vpack.c.b16 %v1224, %v1223
      %v1231 = vpack.c.b16 %v1226, %v1225
      %v1232 = vpack.c.b16 %v1228, %v1227
      %v1242 = vunpack.c.l.b16 %v1204
      %v1243 = vunpack.c.l.b16 %v1205
      %v1244 = vunpack.c.l.b16 %v1206
      %v1245 = vunpack.c.l.b16 %v1207
      %v1246 = vunpack.c.l.b16 %v1208
      %v1247 = vunpack.c.l.b16 %v1209
      %v1248 = vunpack.c.l.b16 %v1210
      %v1249 = vunpack.c.l.b16 %v1211
      %v1250 = vunpack.c.l.b16 %v1212
      %v1251 = vpack.c.b16 %v1243, %v1242
      %v1252 = vpack.c.b16 %v1245, %v1244
      %v1253 = vpack.c.b16 %v1247, %v1246
      %v1254 = vpack.c.b16 %v1249, %v1248
      %v1255 = vpack.c.b16 %v1250, %v1250
      %vm1260 = vcmask 588800
      %v1262 = vsel %vm1260, %v1229, 0
      %v1265 = vsel %vm1260, %v1230, 0
      %v1268 = vsel %vm1260, %v1231, 0
      %v1271 = vsel %vm1260, %v1232, 0
      %vm1273 = vcmask 1043456
      %v1275 = vsel %vm1273, %v1255, 0
      %1277 = vmatprep.subr.bf16.mxu0 0
      %1278 = vmatpush1.bf16.msra.mxu0 0
      %1279 = vmatprep.subr.bf16.mxu0 0
      %1280 = vmatpush1.bf16.msra.mxu0 0
      %1281 = vmatprep.subr.bf16.mxu0 0
      %1282 = vmatpush1.bf16.msra.mxu0 0
      %1283 = vmatprep.subr.bf16.mxu0 0
      %1284 = vmatpush1.bf16.msra.mxu0 %v1275
      %1285 = vmatprep.subr.bf16.mxu0 0
      %1286 = vmatpush1.bf16.msra.mxu0 %v1254
      %1287 = vmatprep.subr.bf16.mxu0 0
      %1288 = vmatpush1.bf16.msra.mxu0 %v1253
      %1289 = vmatprep.subr.bf16.mxu0 0
      %1290 = vmatpush1.bf16.msra.mxu0 %v1252
      %1291 = vmatprep.subr.bf16.mxu0 0
      %1292 = vmatpush1.bf16.msra.mxu0 %v1251
      %1293 = vmatprep.subr.bf16.mxu0 0
      %1294 = vmatpush2.bf16.msra.mxu0 0
      %1295 = vmatprep.subr.bf16.mxu0 0
      %1296 = vmatpush2.bf16.msra.mxu0 0
      %1297 = vmatprep.subr.bf16.mxu0 0
      %1298 = vmatpush2.bf16.msra.mxu0 0
      %1299 = vmatprep.subr.bf16.mxu0 0
      %1300 = vmatpush2.bf16.msra.mxu0 0
      %1301 = vmatprep.subr.bf16.mxu0 0
      %1302 = vmatpush2.bf16.msra.mxu0 0
      %1303 = vmatprep.subr.bf16.mxu0 0
      %1304 = vmatpush2.bf16.msra.mxu0 0
      %1305 = vmatprep.subr.bf16.mxu0 0
      %1306 = vmatpush2.bf16.msra.mxu0 0
      %1307 = vmatprep.subr.bf16.mxu0 0
      %1308 = vmatpush2.bf16.msra.mxu0 0
      %1309 = vmatprep.mubr.bf16.mxu0 0
      %1310 = vmatmul.mubr.bf16.gmra.mxu0 %v1262
      %v1311 = vpop.f32.mrf.mxu0
      %v1312 = vadd.f32 0.0, %v1311
      %v1313 = vpop.f32.mrf.mxu0
      %v1314 = vpop.f32.mrf.mxu0
      %v1315 = vadd.f32 0.0, %v1314
      %v1316 = vpop.f32.mrf.mxu0
      %1317 = vmatprep.mubr.bf16.mxu0 0
      %1318 = vmatmul.mubr.bf16.gmra.mxu0 %v1265
      %v1319 = vpop.f32.mrf.mxu0
      %v1320 = vadd.f32 0.0, %v1319
      %v1321 = vpop.f32.mrf.mxu0
      %v1322 = vpop.f32.mrf.mxu0
      %v1323 = vadd.f32 0.0, %v1322
      %v1324 = vpop.f32.mrf.mxu0
      %1325 = vmatprep.mubr.bf16.mxu0 0
      %1326 = vmatmul.mubr.bf16.gmra.mxu0 %v1268
      %v1327 = vpop.f32.mrf.mxu0
      %v1328 = vadd.f32 0.0, %v1327
      %v1329 = vpop.f32.mrf.mxu0
      %v1330 = vpop.f32.mrf.mxu0
      %v1331 = vadd.f32 0.0, %v1330
      %v1332 = vpop.f32.mrf.mxu0
      %1333 = vmatprep.mubr.bf16.mxu0 0
      %1334 = vmatmul.mubr.bf16.gmra.mxu0 %v1271
      %v1335 = vpop.f32.mrf.mxu0
      %v1336 = vadd.f32 0.0, %v1335
      %v1337 = vpop.f32.mrf.mxu0
      %v1338 = vpop.f32.mrf.mxu0
      %v1339 = vadd.f32 0.0, %v1338
      %v1340 = vpop.f32.mrf.mxu0
      %1341 = vdwg.mxu0
      %1342 = vst.msk [vmem:[%s222] sm:$0xff] %vm1060, %v1312
      %1343 = vst.msk [vmem:[%s222 + $0x8] sm:$0xff] %vm1060, %v1315
      %1344 = vst.msk [vmem:[%s222 + $0x10] sm:$0xff] %vm1060, %v1320
      %1345 = vst.msk [vmem:[%s222 + $0x18] sm:$0xff] %vm1060, %v1323
      %1346 = vst.msk [vmem:[%s222 + $0x20] sm:$0xff] %vm1060, %v1328
      %1347 = vst.msk [vmem:[%s222 + $0x28] sm:$0xff] %vm1060, %v1331
      %1348 = vst.msk [vmem:[%s222 + $0x30] sm:$0xff] %vm1060, %v1336
      %1349 = vst.msk [vmem:[%s222 + $0x38] sm:$0xff] %vm1060, %v1339
      %v1350 = vsel %vm1060, %v1312, 0.0
      %v1351 = vsel %vm1060, %v1315, 0.0
      %v1352 = vadd.f32 %v1350, %v1351
      %v1353 = vsel %vm1060, %v1320, 0.0
      %v1354 = vadd.f32 %v1352, %v1353
      %v1355 = vsel %vm1060, %v1323, 0.0
      %v1356 = vadd.f32 %v1354, %v1355
      %v1357 = vsel %vm1060, %v1328, 0.0
      %v1358 = vadd.f32 %v1356, %v1357
      %v1359 = vsel %vm1060, %v1331, 0.0
      %v1360 = vadd.f32 %v1358, %v1359
      %v1361 = vsel %vm1060, %v1336, 0.0
      %v1362 = vadd.f32 %v1360, %v1361
      %v1363 = vsel %vm1060, %v1339, 0.0
      %v1364 = vadd.f32 %v1362, %v1363
      %v1365 = vrot.slane %v1364, 4
      %v1366 = vadd.f32 %v1364, %v1365
      %v1367 = vrot.slane %v1366, 2
      %v1368 = vadd.f32 %v1366, %v1367
      %v1369 = vrot.slane %v1368, 1
      %v1370 = vadd.f32 %v1368, %v1369
      %v1371 = vmul.f32 %v1312, %v1312
      %v1372 = vmul.f32 %v1315, %v1315
      %v1373 = vmul.f32 %v1320, %v1320
      %v1374 = vmul.f32 %v1323, %v1323
      %v1375 = vmul.f32 %v1328, %v1328
      %v1376 = vmul.f32 %v1331, %v1331
      %v1377 = vmul.f32 %v1336, %v1336
      %v1378 = vmul.f32 %v1339, %v1339
      %v1379 = vsel %vm1060, %v1371, 0.0
      %v1380 = vsel %vm1060, %v1372, 0.0
      %v1381 = vadd.f32 %v1379, %v1380
      %v1382 = vsel %vm1060, %v1373, 0.0
      %v1383 = vadd.f32 %v1381, %v1382
      %v1384 = vsel %vm1060, %v1374, 0.0
      %v1385 = vadd.f32 %v1383, %v1384
      %v1386 = vsel %vm1060, %v1375, 0.0
      %v1387 = vadd.f32 %v1385, %v1386
      %v1388 = vsel %vm1060, %v1376, 0.0
      %v1389 = vadd.f32 %v1387, %v1388
      %v1390 = vsel %vm1060, %v1377, 0.0
      %v1391 = vadd.f32 %v1389, %v1390
      %v1392 = vsel %vm1060, %v1378, 0.0
      %v1393 = vadd.f32 %v1391, %v1392
      %v1394 = vrot.slane %v1393, 4
      %v1395 = vadd.f32 %v1393, %v1394
      %v1396 = vrot.slane %v1395, 2
      %v1397 = vadd.f32 %v1395, %v1396
      %v1398 = vrot.slane %v1397, 1
      %v1399 = vadd.f32 %v1397, %v1398
      %vm1400 = vcmask 1040384
      %v1401 = vsel %vm1400, %v1370, %v1399
      %p1402 = scmp.eq.s32.totalorder %s17, 0
      // Predicated region
      $region37: #{unet_downsample.4} parent=35 // pred_check
        %p1403 = pneg %p1402
      $region38: #{unet_downsample.4} parent=35 // pred_check_branch
        %1405 = sbr.rel (%p1403) target = $region40
      $region39: #{unet_downsample.4} parent=35 // pred_region
        %vm1406 = vcmask 58368
        %1407 = vst.msk [vmem:[%s5] sm:$0x3] %vm1406, %v1401
      $region40: #{unet_downsample.4} parent=35 // pred_fallthru
        _
      %p1408 = scmp.ne.s32.totalorder %s17, 0
      // Predicated region
      $region41: #{unet_downsample.4} parent=35 // pred_check
        %p1409 = pneg %p1408
      $region42: #{unet_downsample.4} parent=35 // pred_check_branch
        %1411 = sbr.rel (%p1409) target = $region44
      $region43: #{unet_downsample.4} parent=35 // pred_region
        %v1412 = vld [vmem:[%s5] sm:$0x3]
        %v1413 = vadd.f32 %v1412, %v1401
        %vm1414 = vcmask 58368
        %1415 = vst.msk [vmem:[%s5] sm:$0x3] %vm1414, %v1413
      $region44: #{unet_downsample.4} parent=35 // pred_fallthru
        _
      %p1416 = scmp.lt.s32.totalorder %s17, 1
      %s1417 = scalar_select %p1416, %s17, 1
      %s1418 = smul.addr %s1417, 8
      %s1419 = smul.addr %s1418, 8
      %s1420 = scalar_lea.vmem %s4, %s1419
      // Predicated region
      $region45: #{unet_downsample.4} parent=35 // pred_check
        %p1421 = pneg %p124
      $region46: #{unet_downsample.4} parent=35 // pred_check_branch
        %1423 = sbr.rel (%p1421) target = $region48
      $region47: #{unet_downsample.4} parent=35 // pred_region
        _
      $region48: #{unet_downsample.4} parent=35 // pred_fallthru
        _
      // Predicated region
      $region49: #{unet_downsample.4} parent=35 // pred_check
        %p1424 = pneg %p145
      $region50: #{unet_downsample.4} parent=35 // pred_check_branch
        %1426 = sbr.rel (%p1424) target = $region52
      $region51: #{unet_downsample.4} parent=35 // pred_region
        _
      $region52: #{unet_downsample.4} parent=35 // pred_fallthru
        _
      // Predicated region
      $region53: #{unet_downsample.4} parent=35 // pred_check
        %p1427 = pneg %p145
      $region54: #{unet_downsample.4} parent=35 // pred_check_branch
        %1429 = sbr.rel (%p1427) target = $region56
      $region55: #{unet_downsample.4} parent=35 // pred_region
        _
      $region56: #{unet_downsample.4} parent=35 // pred_fallthru
        _
    $region36: #{unet_downsample.4} parent=5 // pred_fallthru
      _
    %p1430 = scmp.le.s32.totalorder 2, %s12
    // Predicated region
    $region57: #{unet_downsample.4} parent=5 // pred_check
      %p1431 = pneg %p1430
    $region58: #{unet_downsample.4} parent=5 // pred_check_branch
      %1433 = sbr.rel (%p1431) target = $region60
    $region59: #{unet_downsample.4} parent=5 // pred_region
      %s1434 = ssub.s32 %s12, 2
      // Predicated region
      $region61: #{unet_downsample.4} parent=59 // pred_check
        %p1435 = pneg %p130
      $region62: #{unet_downsample.4} parent=59 // pred_check_branch
        %1437 = sbr.rel (%p1435) target = $region64
      $region63: #{unet_downsample.4} parent=59 // pred_region
        %p1438 = scmp.lt.s32.totalorder %s18, 1
        %s1439 = scalar_select %p1438, %s18, 1
        %s1440 = smul.addr %s1439, 8
        %s1441 = smul.addr %s1440, 8
        %s1442 = scalar_lea.vmem %s4, %s1441
      $region64: #{unet_downsample.4} parent=59 // pred_fallthru
        _
    $region60: #{unet_downsample.4} parent=5 // pred_fallthru
      _
  $region6: #{unet_downsample.4} parent=0 // loop_footer
    %s16 = sadd.s32 1, %s12
  $region7: #{unet_downsample.4} parent=0 // loop_footer_branch
    %11 = sbr.rel target = $region3
  $region8: #{unet_downsample.4} parent=0 // loop_exit
    _

</llo_original>
